<compile_context>
chip_gen: v6e
topology: v6e:2x2x1
jax: 0.10.0
libtpu: 0.0.40
codegen_flags: <defaults>
</compile_context>

<pallas_src>
import math
import functools

import jax
import jax.numpy as jnp
from jax import lax
from jax.experimental import pallas as pl
from jax.experimental.pallas import tpu as pltpu


def _cross_attn_kernel(scale, num_heads, head_dim,
                       x_ref, ctx_ref, wq_ref, wk_ref, wv_ref, wp_ref, bp_ref,
                       o_ref):
    x = x_ref[0]        # (TQ, C)  native dtype
    ctx = ctx_ref[0]    # (cN, C)  native dtype

    # Full-width projections, f32 accumulation on the MXU.
    q = jnp.dot(x, wq_ref[...], preferred_element_type=jnp.float32)     # (TQ, C)
    k = jnp.dot(ctx, wk_ref[...], preferred_element_type=jnp.float32)   # (cN, C)
    v = jnp.dot(ctx, wv_ref[...], preferred_element_type=jnp.float32)   # (cN, C)

    # Fold the softmax scale into q (smaller than scaling per-head (TQ,cN) scores).
    q = q * jnp.float32(scale)

    head_outs = []
    for h in range(num_heads):  # static loop; heads all live in one grid step
        sl = slice(h * head_dim, (h + 1) * head_dim)
        qh = q[:, sl]           # (TQ, hd) f32
        kh = k[:, sl]           # (cN, hd) f32
        vh = v[:, sl]           # (cN, hd) f32

        # scores: contract last dims -> (TQ, cN); no explicit transpose
        s = lax.dot_general(qh, kh, (((1,), (1,)), ((), ())),
                            preferred_element_type=jnp.float32)

        # softmax (keep exp/normalization in f32); normalize AFTER p@v on the
        # narrow (TQ, hd) head output instead of the wide (TQ, cN) probs.
        m = jnp.max(s, axis=-1, keepdims=True)
        p = jnp.exp(s - m)
        denom = jnp.sum(p, axis=-1, keepdims=True)

        oh = jnp.dot(p.astype(vh.dtype), vh,
                     preferred_element_type=jnp.float32)                # (TQ, hd)
        oh = oh * pl.reciprocal(denom, approx=True)
        head_outs.append(oh)

    attn_out = jnp.concatenate(head_outs, axis=-1)                      # (TQ, C)

    # Single full-K output projection + bias.
    out = jnp.dot(attn_out.astype(wp_ref.dtype), wp_ref[...],
                  preferred_element_type=jnp.float32)
    out = out + bp_ref[...].astype(jnp.float32)
    o_ref[0] = out.astype(o_ref.dtype)


def cross_attention(x, context, w_q, w_kv, w_proj, b_proj, num_heads):
    B, xN, C = x.shape
    _, cN, _ = context.shape
    hd = C // num_heads
    scale = hd ** (-0.5)

    # Query tiling: full xN for small sequences; 512/256/128-row tiles when large & divisible
    # (keeps (8,128)-rule satisfied and resident set within v7x's smaller VMEM).
    TQ = xN
    for cand in (512, 256, 128):
        if xN > cand and xN % cand == 0:
            TQ = cand
            break
    num_q_tiles = xN // TQ

    # torch Linear: y = x @ W^T with W (out, in) -> pass full transposed (in, out) weights.
    wq_t = w_q.T                 # (C, C)
    wk_t = w_kv[:C].T            # (C, C)
    wv_t = w_kv[C:].T            # (C, C)
    wp_t = w_proj.T              # (C, C)
    bp = b_proj.reshape(1, C)

    kernel = functools.partial(_cross_attn_kernel, scale, num_heads, hd)

    return pl.pallas_call(
        kernel,
        out_shape=jax.ShapeDtypeStruct((B, xN, C), x.dtype),
        grid_spec=pltpu.PrefetchScalarGridSpec(
            num_scalar_prefetch=0,
            grid=(B, num_q_tiles),
            in_specs=[
                pl.BlockSpec((1, TQ, C), lambda b, qi: (b, qi, 0)),   # x (query tile)
                pl.BlockSpec((1, cN, C), lambda b, qi: (b, 0, 0)),    # context
                pl.BlockSpec((C, C), lambda b, qi: (0, 0)),           # Wq^T
                pl.BlockSpec((C, C), lambda b, qi: (0, 0)),           # Wk^T
                pl.BlockSpec((C, C), lambda b, qi: (0, 0)),           # Wv^T
                pl.BlockSpec((C, C), lambda b, qi: (0, 0)),           # Wproj^T
                pl.BlockSpec((1, C), lambda b, qi: (0, 0)),           # proj bias
            ],
            out_specs=pl.BlockSpec((1, TQ, C), lambda b, qi: (b, qi, 0)),
        ),
        compiler_params=pltpu.CompilerParams(
            dimension_semantics=("parallel", "parallel"),
            vmem_limit_bytes=48 * 1024 * 1024),
    )(x, context, wq_t, wk_t, wv_t, wp_t, bp)


def cross_attention_ref(x, context, w_q, w_kv, w_proj, b_proj, num_heads):
    """Pure-JAX reference mirroring the PyTorch forward."""
    B, xN, C = x.shape
    cN = context.shape[1]
    hd = C // num_heads
    scale = hd ** (-0.5)
    q = (x @ w_q.T).reshape(B, xN, num_heads, hd).transpose(0, 2, 1, 3)
    kv = (context @ w_kv.T).reshape(B, cN, 2, num_heads, hd).transpose(2, 0, 3, 1, 4)
    k, v = kv[0], kv[1]
    attn = jnp.einsum('bhqd,bhkd->bhqk', q, k) * scale
    attn = jax.nn.softmax(attn, axis=-1)
    out = jnp.einsum('bhqk,bhkd->bhqd', attn, v).transpose(0, 2, 1, 3).reshape(B, xN, C)
    return out @ w_proj.T + b_proj


if __name__ == "__main__":
    B, xN, cN, C, H = 2, 8, 16, 32, 8

    key = jax.random.PRNGKey(0)
    kx, kc, kq, kkv, kp, kb = jax.random.split(key, 6)

    x = jax.random.normal(kx, (B, xN, C), dtype=jnp.float32)
    context = jax.random.normal(kc, (B, cN, C), dtype=jnp.float32)

    # deterministic parameter init (torch Linear shapes: (out_features, in_features))
    w_q = jax.random.normal(kq, (C, C), dtype=jnp.float32) * (1.0 / math.sqrt(C))
    w_kv = jax.random.normal(kkv, (2 * C, C), dtype=jnp.float32) * (1.0 / math.sqrt(C))
    w_proj = jax.random.normal(kp, (C, C), dtype=jnp.float32) * (1.0 / math.sqrt(C))
    b_proj = jax.random.normal(kb, (C,), dtype=jnp.float32) * 0.1

    out = cross_attention(x, context, w_q, w_kv, w_proj, b_proj, H)
    out = jax.block_until_ready(out)

    ref = cross_attention_ref(x, context, w_q, w_kv, w_proj, b_proj, H)
    assert out.shape == (B, xN, C)
    # tolerance accounts for the approx (EUP) reciprocal in the softmax normalization
    assert jnp.allclose(out, ref, atol=5e-3, rtol=5e-3), float(jnp.max(jnp.abs(out - ref)))

    print("KERNEL_OK")
</pallas_src>

<mosaic_0001>
module attributes {stable_mosaic.version = 11 : i64} {
  func.func @_cross_attn_kernel(%arg0: i32, %arg1: i32, %arg2: memref<1x8x32xf32, #tpu.memory_space<vmem>>, %arg3: memref<1x16x32xf32, #tpu.memory_space<vmem>>, %arg4: memref<32x32xf32, #tpu.memory_space<vmem>>, %arg5: memref<32x32xf32, #tpu.memory_space<vmem>>, %arg6: memref<32x32xf32, #tpu.memory_space<vmem>>, %arg7: memref<32x32xf32, #tpu.memory_space<vmem>>, %arg8: memref<1x32xf32, #tpu.memory_space<vmem>>, %arg9: memref<1x8x32xf32, #tpu.memory_space<vmem>>) attributes {dimension_semantics = [#tpu.dimension_semantics<parallel>, #tpu.dimension_semantics<parallel>], iteration_bounds = array<i64: 2, 1>, scalar_prefetch = 0 : i64, scratch_operands = 0 : i64, tpu.core_type = #tpu.core_type<tc>, window_params = [{transform_indices = @transform_0, window_bounds = array<i64: 1, 8, 32>}, {transform_indices = @transform_1, window_bounds = array<i64: 1, 16, 32>}, {pipeline_mode = #tpu.pipeline_mode<synchronous>, transform_indices = @transform_2, window_bounds = array<i64: 32, 32>}, {pipeline_mode = #tpu.pipeline_mode<synchronous>, transform_indices = @transform_3, window_bounds = array<i64: 32, 32>}, {pipeline_mode = #tpu.pipeline_mode<synchronous>, transform_indices = @transform_4, window_bounds = array<i64: 32, 32>}, {pipeline_mode = #tpu.pipeline_mode<synchronous>, transform_indices = @transform_5, window_bounds = array<i64: 32, 32>}, {pipeline_mode = #tpu.pipeline_mode<synchronous>, transform_indices = @transform_6, window_bounds = array<i64: 1, 32>}, {transform_indices = @transform_7, window_bounds = array<i64: 1, 8, 32>}]} {
    %c0 = arith.constant 0 : index
    %c0_0 = arith.constant 0 : index
    %c0_1 = arith.constant 0 : index
    %0 = vector.load %arg2[%c0, %c0_0, %c0_1] : memref<1x8x32xf32, #tpu.memory_space<vmem>>, vector<1x8x32xf32>
    %1 = vector.shape_cast %0 : vector<1x8x32xf32> to vector<8x32xf32>
    %c0_2 = arith.constant 0 : index
    %c0_3 = arith.constant 0 : index
    %c0_4 = arith.constant 0 : index
    %2 = vector.load %arg3[%c0_2, %c0_3, %c0_4] : memref<1x16x32xf32, #tpu.memory_space<vmem>>, vector<1x16x32xf32>
    %3 = vector.shape_cast %2 : vector<1x16x32xf32> to vector<16x32xf32>
    %c0_5 = arith.constant 0 : index
    %c0_6 = arith.constant 0 : index
    %4 = vector.load %arg4[%c0_5, %c0_6] : memref<32x32xf32, #tpu.memory_space<vmem>>, vector<32x32xf32>
    %cst = arith.constant dense<0.000000e+00> : vector<8x32xf32>
    %5 = tpu.matmul %1, %4, %cst {dimension_numbers = #tpu.dot_dimension_numbers<[1], [0], [0], [1], [0, 0, 1, 1], [], []>} : vector<8x32xf32>, vector<32x32xf32>, vector<8x32xf32> -> vector<8x32xf32>
    %c0_7 = arith.constant 0 : index
    %c0_8 = arith.constant 0 : index
    %6 = vector.load %arg5[%c0_7, %c0_8] : memref<32x32xf32, #tpu.memory_space<vmem>>, vector<32x32xf32>
    %cst_9 = arith.constant dense<0.000000e+00> : vector<16x32xf32>
    %7 = tpu.matmul %3, %6, %cst_9 {dimension_numbers = #tpu.dot_dimension_numbers<[1], [0], [0], [1], [0, 0, 1, 1], [], []>} : vector<16x32xf32>, vector<32x32xf32>, vector<16x32xf32> -> vector<16x32xf32>
    %c0_10 = arith.constant 0 : index
    %c0_11 = arith.constant 0 : index
    %8 = vector.load %arg6[%c0_10, %c0_11] : memref<32x32xf32, #tpu.memory_space<vmem>>, vector<32x32xf32>
    %cst_12 = arith.constant dense<0.000000e+00> : vector<16x32xf32>
    %9 = tpu.matmul %3, %8, %cst_12 {dimension_numbers = #tpu.dot_dimension_numbers<[1], [0], [0], [1], [0, 0, 1, 1], [], []>} : vector<16x32xf32>, vector<32x32xf32>, vector<16x32xf32> -> vector<16x32xf32>
    %cst_13 = arith.constant 5.000000e-01 : f32
    %10 = vector.broadcast %cst_13 : f32 to vector<8x32xf32>
    %11 = arith.mulf %5, %10 : vector<8x32xf32>
    %12 = vector.extract_strided_slice %11 {offsets = [0, 0], sizes = [8, 4], strides = [1, 1]} : vector<8x32xf32> to vector<8x4xf32>
    %13 = vector.extract_strided_slice %7 {offsets = [0, 0], sizes = [16, 4], strides = [1, 1]} : vector<16x32xf32> to vector<16x4xf32>
    %14 = vector.extract_strided_slice %9 {offsets = [0, 0], sizes = [16, 4], strides = [1, 1]} : vector<16x32xf32> to vector<16x4xf32>
    %cst_14 = arith.constant dense<0.000000e+00> : vector<8x16xf32>
    %15 = tpu.matmul %12, %13, %cst_14 {dimension_numbers = #tpu.dot_dimension_numbers<[1], [1], [0], [0], [0, 0, 1, 0], [], []>} : vector<8x4xf32>, vector<16x4xf32>, vector<8x16xf32> -> vector<8x16xf32>
    %cst_15 = arith.constant dense<0xFF800000> : vector<8xf32>
    %16 = vector.multi_reduction <maximumf>, %15, %cst_15 [1] : vector<8x16xf32> to vector<8xf32>
    %17 = vector.shape_cast %16 : vector<8xf32> to vector<8x1xf32>
    %18 = vector.broadcast %17 : vector<8x1xf32> to vector<8x16xf32>
    %19 = arith.subf %15, %18 : vector<8x16xf32>
    %20 = math.exp %19 : vector<8x16xf32>
    %cst_16 = arith.constant dense<0.000000e+00> : vector<8xf32>
    %21 = vector.multi_reduction <add>, %20, %cst_16 [1] : vector<8x16xf32> to vector<8xf32>
    %22 = vector.shape_cast %21 : vector<8xf32> to vector<8x1xf32>
    %cst_17 = arith.constant dense<0.000000e+00> : vector<8x4xf32>
    %23 = tpu.matmul %20, %14, %cst_17 {dimension_numbers = #tpu.dot_dimension_numbers<[1], [0], [0], [1], [0, 0, 1, 1], [], []>} : vector<8x16xf32>, vector<16x4xf32>, vector<8x4xf32> -> vector<8x4xf32>
    %24 = tpu.reciprocal %22 {approx = true} : vector<8x1xf32> -> vector<8x1xf32>
    %25 = vector.broadcast %24 : vector<8x1xf32> to vector<8x4xf32>
    %26 = arith.mulf %23, %25 : vector<8x4xf32>
    %27 = vector.extract_strided_slice %11 {offsets = [0, 4], sizes = [8, 4], strides = [1, 1]} : vector<8x32xf32> to vector<8x4xf32>
    %28 = vector.extract_strided_slice %7 {offsets = [0, 4], sizes = [16, 4], strides = [1, 1]} : vector<16x32xf32> to vector<16x4xf32>
    %29 = vector.extract_strided_slice %9 {offsets = [0, 4], sizes = [16, 4], strides = [1, 1]} : vector<16x32xf32> to vector<16x4xf32>
    %cst_18 = arith.constant dense<0.000000e+00> : vector<8x16xf32>
    %30 = tpu.matmul %27, %28, %cst_18 {dimension_numbers = #tpu.dot_dimension_numbers<[1], [1], [0], [0], [0, 0, 1, 0], [], []>} : vector<8x4xf32>, vector<16x4xf32>, vector<8x16xf32> -> vector<8x16xf32>
    %cst_19 = arith.constant dense<0xFF800000> : vector<8xf32>
    %31 = vector.multi_reduction <maximumf>, %30, %cst_19 [1] : vector<8x16xf32> to vector<8xf32>
    %32 = vector.shape_cast %31 : vector<8xf32> to vector<8x1xf32>
    %33 = vector.broadcast %32 : vector<8x1xf32> to vector<8x16xf32>
    %34 = arith.subf %30, %33 : vector<8x16xf32>
    %35 = math.exp %34 : vector<8x16xf32>
    %cst_20 = arith.constant dense<0.000000e+00> : vector<8xf32>
    %36 = vector.multi_reduction <add>, %35, %cst_20 [1] : vector<8x16xf32> to vector<8xf32>
    %37 = vector.shape_cast %36 : vector<8xf32> to vector<8x1xf32>
    %cst_21 = arith.constant dense<0.000000e+00> : vector<8x4xf32>
    %38 = tpu.matmul %35, %29, %cst_21 {dimension_numbers = #tpu.dot_dimension_numbers<[1], [0], [0], [1], [0, 0, 1, 1], [], []>} : vector<8x16xf32>, vector<16x4xf32>, vector<8x4xf32> -> vector<8x4xf32>
    %39 = tpu.reciprocal %37 {approx = true} : vector<8x1xf32> -> vector<8x1xf32>
    %40 = vector.broadcast %39 : vector<8x1xf32> to vector<8x4xf32>
    %41 = arith.mulf %38, %40 : vector<8x4xf32>
    %42 = vector.extract_strided_slice %11 {offsets = [0, 8], sizes = [8, 4], strides = [1, 1]} : vector<8x32xf32> to vector<8x4xf32>
    %43 = vector.extract_strided_slice %7 {offsets = [0, 8], sizes = [16, 4], strides = [1, 1]} : vector<16x32xf32> to vector<16x4xf32>
    %44 = vector.extract_strided_slice %9 {offsets = [0, 8], sizes = [16, 4], strides = [1, 1]} : vector<16x32xf32> to vector<16x4xf32>
    %cst_22 = arith.constant dense<0.000000e+00> : vector<8x16xf32>
    %45 = tpu.matmul %42, %43, %cst_22 {dimension_numbers = #tpu.dot_dimension_numbers<[1], [1], [0], [0], [0, 0, 1, 0], [], []>} : vector<8x4xf32>, vector<16x4xf32>, vector<8x16xf32> -> vector<8x16xf32>
    %cst_23 = arith.constant dense<0xFF800000> : vector<8xf32>
    %46 = vector.multi_reduction <maximumf>, %45, %cst_23 [1] : vector<8x16xf32> to vector<8xf32>
    %47 = vector.shape_cast %46 : vector<8xf32> to vector<8x1xf32>
    %48 = vector.broadcast %47 : vector<8x1xf32> to vector<8x16xf32>
    %49 = arith.subf %45, %48 : vector<8x16xf32>
    %50 = math.exp %49 : vector<8x16xf32>
    %cst_24 = arith.constant dense<0.000000e+00> : vector<8xf32>
    %51 = vector.multi_reduction <add>, %50, %cst_24 [1] : vector<8x16xf32> to vector<8xf32>
    %52 = vector.shape_cast %51 : vector<8xf32> to vector<8x1xf32>
    %cst_25 = arith.constant dense<0.000000e+00> : vector<8x4xf32>
    %53 = tpu.matmul %50, %44, %cst_25 {dimension_numbers = #tpu.dot_dimension_numbers<[1], [0], [0], [1], [0, 0, 1, 1], [], []>} : vector<8x16xf32>, vector<16x4xf32>, vector<8x4xf32> -> vector<8x4xf32>
    %54 = tpu.reciprocal %52 {approx = true} : vector<8x1xf32> -> vector<8x1xf32>
    %55 = vector.broadcast %54 : vector<8x1xf32> to vector<8x4xf32>
    %56 = arith.mulf %53, %55 : vector<8x4xf32>
    %57 = vector.extract_strided_slice %11 {offsets = [0, 12], sizes = [8, 4], strides = [1, 1]} : vector<8x32xf32> to vector<8x4xf32>
    %58 = vector.extract_strided_slice %7 {offsets = [0, 12], sizes = [16, 4], strides = [1, 1]} : vector<16x32xf32> to vector<16x4xf32>
    %59 = vector.extract_strided_slice %9 {offsets = [0, 12], sizes = [16, 4], strides = [1, 1]} : vector<16x32xf32> to vector<16x4xf32>
    %cst_26 = arith.constant dense<0.000000e+00> : vector<8x16xf32>
    %60 = tpu.matmul %57, %58, %cst_26 {dimension_numbers = #tpu.dot_dimension_numbers<[1], [1], [0], [0], [0, 0, 1, 0], [], []>} : vector<8x4xf32>, vector<16x4xf32>, vector<8x16xf32> -> vector<8x16xf32>
    %cst_27 = arith.constant dense<0xFF800000> : vector<8xf32>
    %61 = vector.multi_reduction <maximumf>, %60, %cst_27 [1] : vector<8x16xf32> to vector<8xf32>
    %62 = vector.shape_cast %61 : vector<8xf32> to vector<8x1xf32>
    %63 = vector.broadcast %62 : vector<8x1xf32> to vector<8x16xf32>
    %64 = arith.subf %60, %63 : vector<8x16xf32>
    %65 = math.exp %64 : vector<8x16xf32>
    %cst_28 = arith.constant dense<0.000000e+00> : vector<8xf32>
    %66 = vector.multi_reduction <add>, %65, %cst_28 [1] : vector<8x16xf32> to vector<8xf32>
    %67 = vector.shape_cast %66 : vector<8xf32> to vector<8x1xf32>
    %cst_29 = arith.constant dense<0.000000e+00> : vector<8x4xf32>
    %68 = tpu.matmul %65, %59, %cst_29 {dimension_numbers = #tpu.dot_dimension_numbers<[1], [0], [0], [1], [0, 0, 1, 1], [], []>} : vector<8x16xf32>, vector<16x4xf32>, vector<8x4xf32> -> vector<8x4xf32>
    %69 = tpu.reciprocal %67 {approx = true} : vector<8x1xf32> -> vector<8x1xf32>
    %70 = vector.broadcast %69 : vector<8x1xf32> to vector<8x4xf32>
    %71 = arith.mulf %68, %70 : vector<8x4xf32>
    %72 = vector.extract_strided_slice %11 {offsets = [0, 16], sizes = [8, 4], strides = [1, 1]} : vector<8x32xf32> to vector<8x4xf32>
    %73 = vector.extract_strided_slice %7 {offsets = [0, 16], sizes = [16, 4], strides = [1, 1]} : vector<16x32xf32> to vector<16x4xf32>
    %74 = vector.extract_strided_slice %9 {offsets = [0, 16], sizes = [16, 4], strides = [1, 1]} : vector<16x32xf32> to vector<16x4xf32>
    %cst_30 = arith.constant dense<0.000000e+00> : vector<8x16xf32>
    %75 = tpu.matmul %72, %73, %cst_30 {dimension_numbers = #tpu.dot_dimension_numbers<[1], [1], [0], [0], [0, 0, 1, 0], [], []>} : vector<8x4xf32>, vector<16x4xf32>, vector<8x16xf32> -> vector<8x16xf32>
    %cst_31 = arith.constant dense<0xFF800000> : vector<8xf32>
    %76 = vector.multi_reduction <maximumf>, %75, %cst_31 [1] : vector<8x16xf32> to vector<8xf32>
    %77 = vector.shape_cast %76 : vector<8xf32> to vector<8x1xf32>
    %78 = vector.broadcast %77 : vector<8x1xf32> to vector<8x16xf32>
    %79 = arith.subf %75, %78 : vector<8x16xf32>
    %80 = math.exp %79 : vector<8x16xf32>
    %cst_32 = arith.constant dense<0.000000e+00> : vector<8xf32>
    %81 = vector.multi_reduction <add>, %80, %cst_32 [1] : vector<8x16xf32> to vector<8xf32>
    %82 = vector.shape_cast %81 : vector<8xf32> to vector<8x1xf32>
    %cst_33 = arith.constant dense<0.000000e+00> : vector<8x4xf32>
    %83 = tpu.matmul %80, %74, %cst_33 {dimension_numbers = #tpu.dot_dimension_numbers<[1], [0], [0], [1], [0, 0, 1, 1], [], []>} : vector<8x16xf32>, vector<16x4xf32>, vector<8x4xf32> -> vector<8x4xf32>
    %84 = tpu.reciprocal %82 {approx = true} : vector<8x1xf32> -> vector<8x1xf32>
    %85 = vector.broadcast %84 : vector<8x1xf32> to vector<8x4xf32>
    %86 = arith.mulf %83, %85 : vector<8x4xf32>
    %87 = vector.extract_strided_slice %11 {offsets = [0, 20], sizes = [8, 4], strides = [1, 1]} : vector<8x32xf32> to vector<8x4xf32>
    %88 = vector.extract_strided_slice %7 {offsets = [0, 20], sizes = [16, 4], strides = [1, 1]} : vector<16x32xf32> to vector<16x4xf32>
    %89 = vector.extract_strided_slice %9 {offsets = [0, 20], sizes = [16, 4], strides = [1, 1]} : vector<16x32xf32> to vector<16x4xf32>
    %cst_34 = arith.constant dense<0.000000e+00> : vector<8x16xf32>
    %90 = tpu.matmul %87, %88, %cst_34 {dimension_numbers = #tpu.dot_dimension_numbers<[1], [1], [0], [0], [0, 0, 1, 0], [], []>} : vector<8x4xf32>, vector<16x4xf32>, vector<8x16xf32> -> vector<8x16xf32>
    %cst_35 = arith.constant dense<0xFF800000> : vector<8xf32>
    %91 = vector.multi_reduction <maximumf>, %90, %cst_35 [1] : vector<8x16xf32> to vector<8xf32>
    %92 = vector.shape_cast %91 : vector<8xf32> to vector<8x1xf32>
    %93 = vector.broadcast %92 : vector<8x1xf32> to vector<8x16xf32>
    %94 = arith.subf %90, %93 : vector<8x16xf32>
    %95 = math.exp %94 : vector<8x16xf32>
    %cst_36 = arith.constant dense<0.000000e+00> : vector<8xf32>
    %96 = vector.multi_reduction <add>, %95, %cst_36 [1] : vector<8x16xf32> to vector<8xf32>
    %97 = vector.shape_cast %96 : vector<8xf32> to vector<8x1xf32>
    %cst_37 = arith.constant dense<0.000000e+00> : vector<8x4xf32>
    %98 = tpu.matmul %95, %89, %cst_37 {dimension_numbers = #tpu.dot_dimension_numbers<[1], [0], [0], [1], [0, 0, 1, 1], [], []>} : vector<8x16xf32>, vector<16x4xf32>, vector<8x4xf32> -> vector<8x4xf32>
    %99 = tpu.reciprocal %97 {approx = true} : vector<8x1xf32> -> vector<8x1xf32>
    %100 = vector.broadcast %99 : vector<8x1xf32> to vector<8x4xf32>
    %101 = arith.mulf %98, %100 : vector<8x4xf32>
    %102 = vector.extract_strided_slice %11 {offsets = [0, 24], sizes = [8, 4], strides = [1, 1]} : vector<8x32xf32> to vector<8x4xf32>
    %103 = vector.extract_strided_slice %7 {offsets = [0, 24], sizes = [16, 4], strides = [1, 1]} : vector<16x32xf32> to vector<16x4xf32>
    %104 = vector.extract_strided_slice %9 {offsets = [0, 24], sizes = [16, 4], strides = [1, 1]} : vector<16x32xf32> to vector<16x4xf32>
    %cst_38 = arith.constant dense<0.000000e+00> : vector<8x16xf32>
    %105 = tpu.matmul %102, %103, %cst_38 {dimension_numbers = #tpu.dot_dimension_numbers<[1], [1], [0], [0], [0, 0, 1, 0], [], []>} : vector<8x4xf32>, vector<16x4xf32>, vector<8x16xf32> -> vector<8x16xf32>
    %cst_39 = arith.constant dense<0xFF800000> : vector<8xf32>
    %106 = vector.multi_reduction <maximumf>, %105, %cst_39 [1] : vector<8x16xf32> to vector<8xf32>
    %107 = vector.shape_cast %106 : vector<8xf32> to vector<8x1xf32>
    %108 = vector.broadcast %107 : vector<8x1xf32> to vector<8x16xf32>
    %109 = arith.subf %105, %108 : vector<8x16xf32>
    %110 = math.exp %109 : vector<8x16xf32>
    %cst_40 = arith.constant dense<0.000000e+00> : vector<8xf32>
    %111 = vector.multi_reduction <add>, %110, %cst_40 [1] : vector<8x16xf32> to vector<8xf32>
    %112 = vector.shape_cast %111 : vector<8xf32> to vector<8x1xf32>
    %cst_41 = arith.constant dense<0.000000e+00> : vector<8x4xf32>
    %113 = tpu.matmul %110, %104, %cst_41 {dimension_numbers = #tpu.dot_dimension_numbers<[1], [0], [0], [1], [0, 0, 1, 1], [], []>} : vector<8x16xf32>, vector<16x4xf32>, vector<8x4xf32> -> vector<8x4xf32>
    %114 = tpu.reciprocal %112 {approx = true} : vector<8x1xf32> -> vector<8x1xf32>
    %115 = vector.broadcast %114 : vector<8x1xf32> to vector<8x4xf32>
    %116 = arith.mulf %113, %115 : vector<8x4xf32>
    %117 = vector.extract_strided_slice %11 {offsets = [0, 28], sizes = [8, 4], strides = [1, 1]} : vector<8x32xf32> to vector<8x4xf32>
    %118 = vector.extract_strided_slice %7 {offsets = [0, 28], sizes = [16, 4], strides = [1, 1]} : vector<16x32xf32> to vector<16x4xf32>
    %119 = vector.extract_strided_slice %9 {offsets = [0, 28], sizes = [16, 4], strides = [1, 1]} : vector<16x32xf32> to vector<16x4xf32>
    %cst_42 = arith.constant dense<0.000000e+00> : vector<8x16xf32>
    %120 = tpu.matmul %117, %118, %cst_42 {dimension_numbers = #tpu.dot_dimension_numbers<[1], [1], [0], [0], [0, 0, 1, 0], [], []>} : vector<8x4xf32>, vector<16x4xf32>, vector<8x16xf32> -> vector<8x16xf32>
    %cst_43 = arith.constant dense<0xFF800000> : vector<8xf32>
    %121 = vector.multi_reduction <maximumf>, %120, %cst_43 [1] : vector<8x16xf32> to vector<8xf32>
    %122 = vector.shape_cast %121 : vector<8xf32> to vector<8x1xf32>
    %123 = vector.broadcast %122 : vector<8x1xf32> to vector<8x16xf32>
    %124 = arith.subf %120, %123 : vector<8x16xf32>
    %125 = math.exp %124 : vector<8x16xf32>
    %cst_44 = arith.constant dense<0.000000e+00> : vector<8xf32>
    %126 = vector.multi_reduction <add>, %125, %cst_44 [1] : vector<8x16xf32> to vector<8xf32>
    %127 = vector.shape_cast %126 : vector<8xf32> to vector<8x1xf32>
    %cst_45 = arith.constant dense<0.000000e+00> : vector<8x4xf32>
    %128 = tpu.matmul %125, %119, %cst_45 {dimension_numbers = #tpu.dot_dimension_numbers<[1], [0], [0], [1], [0, 0, 1, 1], [], []>} : vector<8x16xf32>, vector<16x4xf32>, vector<8x4xf32> -> vector<8x4xf32>
    %129 = tpu.reciprocal %127 {approx = true} : vector<8x1xf32> -> vector<8x1xf32>
    %130 = vector.broadcast %129 : vector<8x1xf32> to vector<8x4xf32>
    %131 = arith.mulf %128, %130 : vector<8x4xf32>
    %132 = tpu.concatenate %26, %41, %56, %71, %86, %101, %116, %131 in 1 : vector<8x4xf32>, vector<8x4xf32>, vector<8x4xf32>, vector<8x4xf32>, vector<8x4xf32>, vector<8x4xf32>, vector<8x4xf32>, vector<8x4xf32> -> vector<8x32xf32>
    %c0_46 = arith.constant 0 : index
    %c0_47 = arith.constant 0 : index
    %133 = vector.load %arg7[%c0_46, %c0_47] : memref<32x32xf32, #tpu.memory_space<vmem>>, vector<32x32xf32>
    %cst_48 = arith.constant dense<0.000000e+00> : vector<8x32xf32>
    %134 = tpu.matmul %132, %133, %cst_48 {dimension_numbers = #tpu.dot_dimension_numbers<[1], [0], [0], [1], [0, 0, 1, 1], [], []>} : vector<8x32xf32>, vector<32x32xf32>, vector<8x32xf32> -> vector<8x32xf32>
    %c0_49 = arith.constant 0 : index
    %c0_50 = arith.constant 0 : index
    %135 = vector.load %arg8[%c0_49, %c0_50] : memref<1x32xf32, #tpu.memory_space<vmem>>, vector<1x32xf32>
    %136 = vector.broadcast %135 : vector<1x32xf32> to vector<8x32xf32>
    %137 = arith.addf %134, %136 : vector<8x32xf32>
    %c0_51 = arith.constant 0 : index
    %c0_52 = arith.constant 0 : index
    %c0_53 = arith.constant 0 : index
    %138 = vector.load %arg9[%c0_51, %c0_52, %c0_53] : memref<1x8x32xf32, #tpu.memory_space<vmem>>, vector<1x8x32xf32>
    %139 = vector.shape_cast %138 : vector<1x8x32xf32> to vector<8x32xf32>
    %140 = vector.shape_cast %137 : vector<8x32xf32> to vector<1x8x32xf32>
    tpu.vector_store %arg9[%c0_51, %c0_52, %c0_53], %140 {strides = array<i32>} : memref<1x8x32xf32, #tpu.memory_space<vmem>>, vector<1x8x32xf32>,
    return
  }
  func.func @transform_0(%arg0: i32, %arg1: i32) -> (i32, i32, i32) {
    %c0_i32 = arith.constant 0 : i32
    %c0_i32_0 = arith.constant 0 : i32
    return %arg0, %arg1, %c0_i32 : i32, i32, i32
  }
  func.func @transform_1(%arg0: i32, %arg1: i32) -> (i32, i32, i32) {
    %c0_i32 = arith.constant 0 : i32
    %c0_i32_0 = arith.constant 0 : i32
    %c0_i32_1 = arith.constant 0 : i32
    return %arg0, %c0_i32, %c0_i32_0 : i32, i32, i32
  }
  func.func @transform_2(%arg0: i32, %arg1: i32) -> (i32, i32) {
    %c0_i32 = arith.constant 0 : i32
    %c0_i32_0 = arith.constant 0 : i32
    %c0_i32_1 = arith.constant 0 : i32
    return %c0_i32, %c0_i32_0 : i32, i32
  }
  func.func @transform_3(%arg0: i32, %arg1: i32) -> (i32, i32) {
    %c0_i32 = arith.constant 0 : i32
    %c0_i32_0 = arith.constant 0 : i32
    %c0_i32_1 = arith.constant 0 : i32
    return %c0_i32, %c0_i32_0 : i32, i32
  }
  func.func @transform_4(%arg0: i32, %arg1: i32) -> (i32, i32) {
    %c0_i32 = arith.constant 0 : i32
    %c0_i32_0 = arith.constant 0 : i32
    %c0_i32_1 = arith.constant 0 : i32
    return %c0_i32, %c0_i32_0 : i32, i32
  }
  func.func @transform_5(%arg0: i32, %arg1: i32) -> (i32, i32) {
    %c0_i32 = arith.constant 0 : i32
    %c0_i32_0 = arith.constant 0 : i32
    %c0_i32_1 = arith.constant 0 : i32
    return %c0_i32, %c0_i32_0 : i32, i32
  }
  func.func @transform_6(%arg0: i32, %arg1: i32) -> (i32, i32) {
    %c0_i32 = arith.constant 0 : i32
    %c0_i32_0 = arith.constant 0 : i32
    %c0_i32_1 = arith.constant 0 : i32
    return %c0_i32, %c0_i32_0 : i32, i32
  }
  func.func @transform_7(%arg0: i32, %arg1: i32) -> (i32, i32, i32) {
    %c0_i32 = arith.constant 0 : i32
    %c0_i32_0 = arith.constant 0 : i32
    return %arg0, %arg1, %c0_i32 : i32, i32, i32
  }
}

</mosaic_0001>

<llo_original>
// kernel: tpu_custom_call.1
$region0: #{tpu_custom_call.1}
  #allocation0 [shape = 'u32[]', space=smem, size = 0x4, offset = 0x4, fixed_abs, tag = 'smem constant byte address 0x4 - core index']
  #allocation1 [shape = 'u32[144,128]{1,0:T(1,128)}', space=vmem, size = 0x12000, scoped, tag = 'internal scratch']
  %s0 = inlined_call_operand.hbm [shape: f32[2,8,32], index: 0, kind: input, shape index: {}]
  %s1 = inlined_call_operand.hbm [shape: f32[2,16,32], index: 1, kind: input, shape index: {}]
  %s2 = inlined_call_operand.hbm [shape: f32[32,32], index: 2, kind: input, shape index: {}]
  %s3 = inlined_call_operand.hbm [shape: f32[32,32], index: 3, kind: input, shape index: {}]
  %s4 = inlined_call_operand.hbm [shape: f32[32,32], index: 4, kind: input, shape index: {}]
  %s5 = inlined_call_operand.hbm [shape: f32[32,32], index: 5, kind: input, shape index: {}]
  %s6 = inlined_call_operand.vmem [shape: f32[1,32], index: 6, kind: input, shape index: {}]
  %s7 = inlined_call_operand.hbm [shape: f32[2,8,32], index: 7, kind: output, shape index: {}]
  %s8 = sld [smem:[#allocation0]]
  $region85: #{tpu_custom_call.1} parent=0
    _
  %s10 = ssub.s32 1, %s8
  %s11 = scalar_select 0, %s10, %s8
  $region1: #{tpu_custom_call.1} parent=0
    #allocation2 [shape = 'u8[8192]{0}', space=vmem, size = 0x2000, scoped, tag = 'input window, operand 0']
    #allocation3 [shape = 's32[2]{0}', space=sflag, size = 0x8, scoped, tag = 'scoped memory for tpu_custom_call.1']
    #allocation4 [shape = 's32[2]{0}', space=sflag, size = 0x8, scoped, tag = 'scoped memory for tpu_custom_call.1']
    #allocation5 [shape = 'u8[16384]{0}', space=vmem, size = 0x4000, scoped, tag = 'input window, operand 1']
    #allocation6 [shape = 's32[2]{0}', space=sflag, size = 0x8, scoped, tag = 'scoped memory for tpu_custom_call.1']
    #allocation7 [shape = 'u8[16384]{0}', space=vmem, size = 0x4000, scoped, tag = 'input window, operand 2, single buffered']
    #allocation8 [shape = 'u8[16384]{0}', space=vmem, size = 0x4000, scoped, tag = 'input window, operand 3, single buffered']
    #allocation9 [shape = 's32[1]{0}', space=sflag, size = 0x4, scoped, tag = 'scoped memory for tpu_custom_call.1']
    #allocation10 [shape = 'u8[16384]{0}', space=vmem, size = 0x4000, scoped, tag = 'input window, operand 4, single buffered']
    #allocation11 [shape = 'u8[16384]{0}', space=vmem, size = 0x4000, scoped, tag = 'input window, operand 5, single buffered']
    #allocation12 [shape = 's32[1]{0}', space=sflag, size = 0x4, scoped, tag = 'scoped memory for tpu_custom_call.1']
    #allocation13 [shape = 'u8[8192]{0}', space=vmem, size = 0x2000, scoped, tag = 'output window, operand 0']
    %12 = vsyncpa [#allocation3], 0
    %s13 = scalar_lea.sflag [#allocation3], 1
    %14 = vsyncpa %s13, 0
    %15 = vsyncpa [#allocation6], 0
    %s16 = scalar_lea.sflag [#allocation6], 1
    %17 = vsyncpa %s16, 0
    %18 = vsyncpa [#allocation9], 0
    %19 = vsyncpa [#allocation12], 0
    %20 = vsyncpa [#allocation4], 0
    %s21 = scalar_lea.sflag [#allocation4], 1
    %22 = vsyncpa %s21, 0
    loop: start=0, step=1, limit=4
    $region2: #{tpu_custom_call.1} parent=1 // loop_pre_header
      _
    $region3: #{tpu_custom_call.1} parent=1 // loop_header
      %s24 = sphi 0, %s28
      %p25 = scmp.ge.s32.totalorder %s24, 4
      %s31 = sphi 0, %s43
      %s32 = sphi 0, %s39
      %s33 = sphi 0, %s31
      %s34 = sphi 0, %s32
      %s35 = sphi 0, %s33
      %s36 = sphi 0, %s34
      %s48 = sphi 0, %s50
      %s51 = sphi 0, %s48
      %s52 = sphi 0, %s51
      %s68 = sphi 0, %s52
      %s74 = sphi 0, %s76
      %s77 = sphi 0, %s74
      %s78 = sphi 0, %s77
      %s94 = sphi 0, %s78
      %s98 = sphi 0, %s98
      %s100 = sphi 0, %s98
      %s101 = sphi 0, %s100
      %s115 = sphi 0, %s101
      %s119 = sphi 0, %s119
      %s121 = sphi 0, %s119
      %s122 = sphi 0, %s121
      %s136 = sphi 0, %s122
      %s140 = sphi 0, %s140
      %s142 = sphi 0, %s140
      %s143 = sphi 0, %s142
      %s157 = sphi 0, %s143
      %s161 = sphi 0, %s161
      %s163 = sphi 0, %s161
      %s164 = sphi 0, %s163
      %s178 = sphi 0, %s164
      %s182 = sphi 0, %s182
      %s184 = sphi 0, %s182
      %s185 = sphi 0, %s184
      %s199 = sphi 0, %s185
      %s207 = sphi 0, %s209
      %s210 = sphi 0, %s207
      %s211 = sphi 0, %s210
      %s227 = sphi 0, %s211
    $region4: #{tpu_custom_call.1} parent=1 // loop_header_branch
      %27 = sbr.rel (%p25) target = $region8
    $region5: #{tpu_custom_call.1} parent=1 // loop_body
      %s29 = ssub.s32 %s24, 1
      %s30 = ssub.s32 %s24, 2
      %s37 = sadd.s32 1, %s32
      %p38 = scmp.ge.s32.totalorder %s37, 1
      %s39 = scalar_select %p38, 0, %s37
      %s40 = sadd.s32 1, %s31
      %s41 = scalar_select %p38, %s40, %s31
      %p42 = scmp.ge.s32.totalorder %s41, 2
      %s43 = scalar_select %p42, 0, %s41
      %s44 = ssub.s32 %s31, %s43
      %s45 = ssub.s32 %s32, %s39
      %s46 = sor.u32 %s44, %s45
      %p47 = scmp.eq.s32.totalorder %s46, 0
      %s49 = sadd.s32 %s48, 1
      %s50 = scalar_select %p47, %s48, %s49
      %p53 = pneg %p47
      %p54 = scmp.eq.s32.totalorder %s24, 1
      %p55 = por %p53, %p54
      %p56 = scmp.ne.s32.totalorder %s48, %s51
      %p57 = scmp.eq.s32.totalorder %s24, 0
      %p58 = por %p56, %p57
      %p59 = scmp.ne.s32.totalorder %s48, %s51
      %p60 = scmp.eq.s32.totalorder %s29, 1
      %p61 = por %p59, %p60
      %p62 = scmp.ne.s32.totalorder %s51, %s52
      %p63 = scmp.eq.s32.totalorder %s29, 0
      %p64 = por %p62, %p63
      %p65 = scmp.ne.s32.totalorder %s51, %s52
      %p66 = scmp.eq.s32.totalorder %s30, 1
      %p67 = por %p65, %p66
      %p69 = scmp.ne.s32.totalorder %s52, %s68
      %p70 = scmp.eq.s32.totalorder %s30, 0
      %p71 = por %p69, %p70
      %s72 = ssub.s32 %s31, %s43
      %p73 = scmp.eq.s32.totalorder %s72, 0
      %s75 = sadd.s32 %s74, 1
      %s76 = scalar_select %p73, %s74, %s75
      %p79 = pneg %p73
      %p80 = scmp.eq.s32.totalorder %s24, 1
      %p81 = por %p79, %p80
      %p82 = scmp.ne.s32.totalorder %s74, %s77
      %p83 = scmp.eq.s32.totalorder %s24, 0
      %p84 = por %p82, %p83
      %p85 = scmp.ne.s32.totalorder %s74, %s77
      %p86 = scmp.eq.s32.totalorder %s29, 1
      %p87 = por %p85, %p86
      %p88 = scmp.ne.s32.totalorder %s77, %s78
      %p89 = scmp.eq.s32.totalorder %s29, 0
      %p90 = por %p88, %p89
      %p91 = scmp.ne.s32.totalorder %s77, %s78
      %p92 = scmp.eq.s32.totalorder %s30, 1
      %p93 = por %p91, %p92
      %p95 = scmp.ne.s32.totalorder %s78, %s94
      %p96 = scmp.eq.s32.totalorder %s30, 0
      %p97 = por %p95, %p96
      %s99 = sadd.s32 %s98, 1
      %p102 = scmp.eq.s32.totalorder %s24, 1
      %p103 = scmp.ne.s32.totalorder %s98, %s100
      %p104 = scmp.eq.s32.totalorder %s24, 0
      %p105 = por %p103, %p104
      %p106 = scmp.ne.s32.totalorder %s98, %s100
      %p107 = scmp.eq.s32.totalorder %s29, 1
      %p108 = por %p106, %p107
      %p109 = scmp.ne.s32.totalorder %s100, %s101
      %p110 = scmp.eq.s32.totalorder %s29, 0
      %p111 = por %p109, %p110
      %p112 = scmp.ne.s32.totalorder %s100, %s101
      %p113 = scmp.eq.s32.totalorder %s30, 1
      %p114 = por %p112, %p113
      %p116 = scmp.ne.s32.totalorder %s101, %s115
      %p117 = scmp.eq.s32.totalorder %s30, 0
      %p118 = por %p116, %p117
      %s120 = sadd.s32 %s119, 1
      %p123 = scmp.eq.s32.totalorder %s24, 1
      %p124 = scmp.ne.s32.totalorder %s119, %s121
      %p125 = scmp.eq.s32.totalorder %s24, 0
      %p126 = por %p124, %p125
      %p127 = scmp.ne.s32.totalorder %s119, %s121
      %p128 = scmp.eq.s32.totalorder %s29, 1
      %p129 = por %p127, %p128
      %p130 = scmp.ne.s32.totalorder %s121, %s122
      %p131 = scmp.eq.s32.totalorder %s29, 0
      %p132 = por %p130, %p131
      %p133 = scmp.ne.s32.totalorder %s121, %s122
      %p134 = scmp.eq.s32.totalorder %s30, 1
      %p135 = por %p133, %p134
      %p137 = scmp.ne.s32.totalorder %s122, %s136
      %p138 = scmp.eq.s32.totalorder %s30, 0
      %p139 = por %p137, %p138
      %s141 = sadd.s32 %s140, 1
      %p144 = scmp.eq.s32.totalorder %s24, 1
      %p145 = scmp.ne.s32.totalorder %s140, %s142
      %p146 = scmp.eq.s32.totalorder %s24, 0
      %p147 = por %p145, %p146
      %p148 = scmp.ne.s32.totalorder %s140, %s142
      %p149 = scmp.eq.s32.totalorder %s29, 1
      %p150 = por %p148, %p149
      %p151 = scmp.ne.s32.totalorder %s142, %s143
      %p152 = scmp.eq.s32.totalorder %s29, 0
      %p153 = por %p151, %p152
      %p154 = scmp.ne.s32.totalorder %s142, %s143
      %p155 = scmp.eq.s32.totalorder %s30, 1
      %p156 = por %p154, %p155
      %p158 = scmp.ne.s32.totalorder %s143, %s157
      %p159 = scmp.eq.s32.totalorder %s30, 0
      %p160 = por %p158, %p159
      %s162 = sadd.s32 %s161, 1
      %p165 = scmp.eq.s32.totalorder %s24, 1
      %p166 = scmp.ne.s32.totalorder %s161, %s163
      %p167 = scmp.eq.s32.totalorder %s24, 0
      %p168 = por %p166, %p167
      %p169 = scmp.ne.s32.totalorder %s161, %s163
      %p170 = scmp.eq.s32.totalorder %s29, 1
      %p171 = por %p169, %p170
      %p172 = scmp.ne.s32.totalorder %s163, %s164
      %p173 = scmp.eq.s32.totalorder %s29, 0
      %p174 = por %p172, %p173
      %p175 = scmp.ne.s32.totalorder %s163, %s164
      %p176 = scmp.eq.s32.totalorder %s30, 1
      %p177 = por %p175, %p176
      %p179 = scmp.ne.s32.totalorder %s164, %s178
      %p180 = scmp.eq.s32.totalorder %s30, 0
      %p181 = por %p179, %p180
      %s183 = sadd.s32 %s182, 1
      %p186 = scmp.eq.s32.totalorder %s24, 1
      %p187 = scmp.ne.s32.totalorder %s182, %s184
      %p188 = scmp.eq.s32.totalorder %s24, 0
      %p189 = por %p187, %p188
      %p190 = scmp.ne.s32.totalorder %s182, %s184
      %p191 = scmp.eq.s32.totalorder %s29, 1
      %p192 = por %p190, %p191
      %p193 = scmp.ne.s32.totalorder %s184, %s185
      %p194 = scmp.eq.s32.totalorder %s29, 0
      %p195 = por %p193, %p194
      %p196 = scmp.ne.s32.totalorder %s184, %s185
      %p197 = scmp.eq.s32.totalorder %s30, 1
      %p198 = por %p196, %p197
      %p200 = scmp.ne.s32.totalorder %s185, %s199
      %p201 = scmp.eq.s32.totalorder %s30, 0
      %p202 = por %p200, %p201
      %s203 = ssub.s32 %s31, %s43
      %s204 = ssub.s32 %s32, %s39
      %s205 = sor.u32 %s203, %s204
      %p206 = scmp.eq.s32.totalorder %s205, 0
      %s208 = sadd.s32 %s207, 1
      %s209 = scalar_select %p206, %s207, %s208
      %p212 = pneg %p206
      %p213 = scmp.eq.s32.totalorder %s24, 1
      %p214 = por %p212, %p213
      %p215 = scmp.ne.s32.totalorder %s207, %s210
      %p216 = scmp.eq.s32.totalorder %s24, 0
      %p217 = por %p215, %p216
      %p218 = scmp.ne.s32.totalorder %s207, %s210
      %p219 = scmp.eq.s32.totalorder %s29, 1
      %p220 = por %p218, %p219
      %p221 = scmp.ne.s32.totalorder %s210, %s211
      %p222 = scmp.eq.s32.totalorder %s29, 0
      %p223 = por %p221, %p222
      %p224 = scmp.ne.s32.totalorder %s210, %s211
      %p225 = scmp.eq.s32.totalorder %s30, 1
      %p226 = por %p224, %p225
      %p228 = scmp.ne.s32.totalorder %s211, %s227
      %p229 = scmp.eq.s32.totalorder %s30, 0
      %p230 = por %p228, %p229
      %p231 = scmp.le.s32.totalorder 1, %s24
      %p232 = scmp.lt.s32.totalorder %s24, 3
      %p233 = pnand %p231, %p232
      %p234 = pneg %p233
      // Predicated region
      $region9: #{tpu_custom_call.1} parent=5 // pred_check
        _
      $region10: #{tpu_custom_call.1} parent=5 // pred_check_branch
        %236 = sbr.rel (%p233) target = $region12
      $region11: #{tpu_custom_call.1} parent=5 // pred_region
        %s237 = ssub.s32 %s24, 1
        // Predicated region
        $region13: #{tpu_custom_call.1} parent=11 // pred_check
          %p238 = pneg %p111
        $region14: #{tpu_custom_call.1} parent=11 // pred_check_branch
          %240 = sbr.rel (%p238) target = $region16
        $region15: #{tpu_custom_call.1} parent=11 // pred_region
          %s242 = ssub.s32 512, 512
          %243 = vsyncadd [#allocation6], %s242
          %s244 = sshll.u32 [#allocation7], 4
          %s245 = int_to_ptr.vmem [resolvable:$true] %s244
          %250 = dma.hbm_to_vmem [thread:$0]  %s2, 512, %s245, [#allocation6], 128, 128, 8
        $region16: #{tpu_custom_call.1} parent=11 // pred_fallthru
          _
        // Predicated region
        $region17: #{tpu_custom_call.1} parent=11 // pred_check
          %p251 = pneg %p132
        $region18: #{tpu_custom_call.1} parent=11 // pred_check_branch
          %253 = sbr.rel (%p251) target = $region20
        $region19: #{tpu_custom_call.1} parent=11 // pred_region
          %s255 = ssub.s32 512, 512
          %256 = vsyncadd [#allocation9], %s255
          %s257 = sshll.u32 [#allocation8], 4
          %s258 = int_to_ptr.vmem [resolvable:$true] %s257
          %263 = dma.hbm_to_vmem [thread:$0]  %s3, 512, %s258, [#allocation9], 128, 128, 8
        $region20: #{tpu_custom_call.1} parent=11 // pred_fallthru
          _
        // Predicated region
        $region21: #{tpu_custom_call.1} parent=11 // pred_check
          %p264 = pneg %p153
        $region22: #{tpu_custom_call.1} parent=11 // pred_check_branch
          %266 = sbr.rel (%p264) target = $region24
        $region23: #{tpu_custom_call.1} parent=11 // pred_region
          %s268 = ssub.s32 512, 512
          %269 = vsyncadd [#allocation9], %s268
          %s270 = sshll.u32 [#allocation10], 4
          %s271 = int_to_ptr.vmem [resolvable:$true] %s270
          %276 = dma.hbm_to_vmem [thread:$0]  %s4, 512, %s271, [#allocation9], 128, 128, 8
        $region24: #{tpu_custom_call.1} parent=11 // pred_fallthru
          _
        // Predicated region
        $region25: #{tpu_custom_call.1} parent=11 // pred_check
          %p277 = pneg %p174
        $region26: #{tpu_custom_call.1} parent=11 // pred_check_branch
          %279 = sbr.rel (%p277) target = $region28
        $region27: #{tpu_custom_call.1} parent=11 // pred_region
          %s281 = ssub.s32 512, 512
          %282 = vsyncadd [#allocation12], %s281
          %s283 = sshll.u32 [#allocation11], 4
          %s284 = int_to_ptr.vmem [resolvable:$true] %s283
          %289 = dma.hbm_to_vmem [thread:$0]  %s5, 512, %s284, [#allocation12], 128, 128, 8
        $region28: #{tpu_custom_call.1} parent=11 // pred_fallthru
          _
        // Predicated region
        $region29: #{tpu_custom_call.1} parent=11 // pred_check
          %p290 = pneg %p195
        $region30: #{tpu_custom_call.1} parent=11 // pred_check_branch
          %292 = sbr.rel (%p290) target = $region32
        $region31: #{tpu_custom_call.1} parent=11 // pred_region
          _
        $region32: #{tpu_custom_call.1} parent=11 // pred_fallthru
          _
      $region12: #{tpu_custom_call.1} parent=5 // pred_fallthru
        _
      %p293 = scmp.lt.s32.totalorder %s24, 2
      // Predicated region
      $region33: #{tpu_custom_call.1} parent=5 // pred_check
        %p294 = pneg %p293
      $region34: #{tpu_custom_call.1} parent=5 // pred_check_branch
        %296 = sbr.rel (%p294) target = $region36
      $region35: #{tpu_custom_call.1} parent=5 // pred_region
        // Predicated region
        $region37: #{tpu_custom_call.1} parent=35 // pred_check
          %p297 = pneg %p58
        $region38: #{tpu_custom_call.1} parent=35 // pred_check_branch
          %299 = sbr.rel (%p297) target = $region40
        $region39: #{tpu_custom_call.1} parent=35 // pred_region
          %s300 = sand.u32 %s48, 1
          %s301 = scalar_lea.sflag [#allocation3], %s300
          %s302 = sand.u32 %s48, 1
          %s303 = smul.addr %s302, 8
          %s304 = scalar_lea.vmem [#allocation2], %s303
          %s306 = ssub.s32 128, 128
          %307 = vsyncadd %s301, %s306
          %s308 = sadd.s32 %s32, %s31
          %s309 = smul.addr %s308, 128
          %s310 = scalar_lea.hbm %s0, %s309
          %s312 = sshll.u32 %s304, 4
          %s313 = int_to_ptr.vmem [resolvable:$true] %s312
          %315 = dma.hbm_to_vmem [thread:$0]  %s310, 128, %s313, %s301
        $region40: #{tpu_custom_call.1} parent=35 // pred_fallthru
          _
        // Predicated region
        $region41: #{tpu_custom_call.1} parent=35 // pred_check
          %p316 = pneg %p84
        $region42: #{tpu_custom_call.1} parent=35 // pred_check_branch
          %318 = sbr.rel (%p316) target = $region44
        $region43: #{tpu_custom_call.1} parent=35 // pred_region
          %s319 = sand.u32 %s24, 1
          %s320 = scalar_lea.sflag [#allocation6], %s319
          %s321 = sand.u32 %s74, 1
          %s322 = smul.addr %s321, 16
          %s323 = scalar_lea.vmem [#allocation5], %s322
          %s325 = ssub.s32 256, 256
          %326 = vsyncadd %s320, %s325
          %s327 = smul.addr %s31, 2
          %s328 = smul.addr %s327, 128
          %s329 = scalar_lea.hbm %s1, %s328
          %s330 = sshll.u32 %s323, 4
          %s331 = int_to_ptr.vmem [resolvable:$true] %s330
          %336 = dma.hbm_to_vmem [thread:$0]  %s329, 256, %s331, %s320, 128, 128, 8
        $region44: #{tpu_custom_call.1} parent=35 // pred_fallthru
          _
      $region36: #{tpu_custom_call.1} parent=5 // pred_fallthru
        _
      %p337 = scmp.le.s32.totalorder 1, %s24
      %p338 = scmp.lt.s32.totalorder %s24, 3
      %p339 = pnand %p337, %p338
      %p340 = pneg %p339
      // Predicated region
      $region45: #{tpu_custom_call.1} parent=5 // pred_check
        _
      $region46: #{tpu_custom_call.1} parent=5 // pred_check_branch
        %342 = sbr.rel (%p339) target = $region48
      $region47: #{tpu_custom_call.1} parent=5 // pred_region
        %s343 = ssub.s32 %s24, 1
        %s344 = sand.u32 %s51, 1
        %s345 = scalar_lea.sflag [#allocation3], %s344
        %s346 = sand.u32 %s51, 1
        %s347 = smul.addr %s346, 8
        %s348 = scalar_lea.vmem [#allocation2], %s347
        // Predicated region
        $region49: #{tpu_custom_call.1} parent=47 // pred_check
          %p349 = pneg %p64
        $region50: #{tpu_custom_call.1} parent=47 // pred_check_branch
          %351 = sbr.rel (%p349) target = $region52
        $region51: #{tpu_custom_call.1} parent=47 // pred_region
          %352 = dma.done %s345, 128
        $region52: #{tpu_custom_call.1} parent=47 // pred_fallthru
          _
        %s353 = sand.u32 %s29, 1
        %s354 = scalar_lea.sflag [#allocation6], %s353
        %s355 = sand.u32 %s77, 1
        %s356 = smul.addr %s355, 16
        %s357 = scalar_lea.vmem [#allocation5], %s356
        // Predicated region
        $region53: #{tpu_custom_call.1} parent=47 // pred_check
          %p358 = pneg %p90
        $region54: #{tpu_custom_call.1} parent=47 // pred_check_branch
          %360 = sbr.rel (%p358) target = $region56
        $region55: #{tpu_custom_call.1} parent=47 // pred_region
          %361 = dma.done %s354, 256
        $region56: #{tpu_custom_call.1} parent=47 // pred_fallthru
          _
        // Predicated region
        $region57: #{tpu_custom_call.1} parent=47 // pred_check
          %p362 = pneg %p111
        $region58: #{tpu_custom_call.1} parent=47 // pred_check_branch
          %364 = sbr.rel (%p362) target = $region60
        $region59: #{tpu_custom_call.1} parent=47 // pred_region
          %365 = dma.done [#allocation6], 512
        $region60: #{tpu_custom_call.1} parent=47 // pred_fallthru
          _
        // Predicated region
        $region61: #{tpu_custom_call.1} parent=47 // pred_check
          %p366 = pneg %p132
        $region62: #{tpu_custom_call.1} parent=47 // pred_check_branch
          %368 = sbr.rel (%p366) target = $region64
        $region63: #{tpu_custom_call.1} parent=47 // pred_region
          %369 = dma.done [#allocation9], 512
        $region64: #{tpu_custom_call.1} parent=47 // pred_fallthru
          _
        // Predicated region
        $region65: #{tpu_custom_call.1} parent=47 // pred_check
          %p370 = pneg %p153
        $region66: #{tpu_custom_call.1} parent=47 // pred_check_branch
          %372 = sbr.rel (%p370) target = $region68
        $region67: #{tpu_custom_call.1} parent=47 // pred_region
          %373 = dma.done [#allocation9], 512
        $region68: #{tpu_custom_call.1} parent=47 // pred_fallthru
          _
        // Predicated region
        $region69: #{tpu_custom_call.1} parent=47 // pred_check
          %p374 = pneg %p174
        $region70: #{tpu_custom_call.1} parent=47 // pred_check_branch
          %376 = sbr.rel (%p374) target = $region72
        $region71: #{tpu_custom_call.1} parent=47 // pred_region
          %377 = dma.done [#allocation12], 512
        $region72: #{tpu_custom_call.1} parent=47 // pred_fallthru
          _
        %s378 = sand.u32 %s51, 1
        %s379 = scalar_lea.sflag [#allocation3], %s378
        %s380 = sand.u32 %s51, 1
        %s381 = smul.addr %s380, 8
        %s382 = scalar_lea.vmem [#allocation2], %s381
        %p383 = pneg %p64
        %p384 = pneg %p61
        %s385 = sand.u32 %s29, 1
        %s386 = scalar_lea.sflag [#allocation6], %s385
        %s387 = sand.u32 %s77, 1
        %s388 = smul.addr %s387, 16
        %s389 = scalar_lea.vmem [#allocation5], %s388
        %p390 = pneg %p90
        %p391 = pneg %p87
        %p392 = pneg %p111
        %p393 = pneg %p108
        %p394 = pneg %p132
        %p395 = pneg %p129
        %p396 = pneg %p153
        %p397 = pneg %p150
        %p398 = pneg %p174
        %p399 = pneg %p171
        %p400 = pneg %p195
        %p401 = pneg %p192
        %p402 = pneg %p223
        %p403 = pneg %p220
        %s404 = sand.u32 %s210, 1
        %s405 = scalar_lea.sflag [#allocation4], %s404
        %s406 = sand.u32 %s210, 1
        %s407 = smul.addr %s406, 8
        %s408 = scalar_lea.vmem [#allocation13], %s407
        %v409 = vld [vmem:[%s348] sm:$0xff]
        %v410 = vld [vmem:[%s357] sm:$0xff]
        %v411 = vld [vmem:[%s357 + $0x8] sm:$0xff]
        %v412 = vld [vmem:[#allocation7] sm:$0xff]
        %v413 = vld [vmem:[#allocation7 + $0x8] sm:$0xff]
        %v414 = vld [vmem:[#allocation7 + $0x10] sm:$0xff]
        %v415 = vld [vmem:[#allocation7 + $0x18] sm:$0xff]
        %vm416 = vcmask 261120
        %v418 = vsel %vm416, %v409, 0
        %420 = vmatprep.subr.mxu0 0.0
        %421 = vmatpush1.msra.mxu0 0.0
        %422 = vmatprep.subr.mxu0 0.0
        %423 = vmatpush1.msra.mxu0 0.0
        %424 = vmatprep.subr.mxu0 0.0
        %425 = vmatpush1.msra.mxu0 0.0
        %426 = vmatprep.subr.mxu0 0.0
        %427 = vmatpush1.msra.mxu0 0.0
        %428 = vmatprep.subr.mxu0 0.0
        %429 = vmatpush1.msra.mxu0 0.0
        %430 = vmatprep.subr.mxu0 0.0
        %431 = vmatpush1.msra.mxu0 0.0
        %432 = vmatprep.subr.mxu0 0.0
        %433 = vmatpush1.msra.mxu0 0.0
        %434 = vmatprep.subr.mxu0 0.0
        %435 = vmatpush1.msra.mxu0 0.0
        %436 = vmatprep.subr.mxu0 0.0
        %437 = vmatpush1.msra.mxu0 0.0
        %438 = vmatprep.subr.mxu0 0.0
        %439 = vmatpush1.msra.mxu0 0.0
        %440 = vmatprep.subr.mxu0 0.0
        %441 = vmatpush1.msra.mxu0 0.0
        %442 = vmatprep.subr.mxu0 0.0
        %443 = vmatpush1.msra.mxu0 0.0
        %444 = vmatprep.subr.mxu0 0.0
        %445 = vmatpush1.msra.mxu0 %v415
        %446 = vmatprep.subr.mxu0 0.0
        %447 = vmatpush1.msra.mxu0 %v414
        %448 = vmatprep.subr.mxu0 0.0
        %449 = vmatpush1.msra.mxu0 %v413
        %450 = vmatprep.subr.mxu0 0.0
        %451 = vmatpush1.msra.mxu0 %v412
        %452 = vmatprep.subr.mxu0 0.0
        %453 = vmatpush2.msra.mxu0 0.0
        %454 = vmatprep.subr.mxu0 0.0
        %455 = vmatpush2.msra.mxu0 0.0
        %456 = vmatprep.subr.mxu0 0.0
        %457 = vmatpush2.msra.mxu0 0.0
        %458 = vmatprep.subr.mxu0 0.0
        %459 = vmatpush2.msra.mxu0 0.0
        %460 = vmatprep.subr.mxu0 0.0
        %461 = vmatpush2.msra.mxu0 0.0
        %462 = vmatprep.subr.mxu0 0.0
        %463 = vmatpush2.msra.mxu0 0.0
        %464 = vmatprep.subr.mxu0 0.0
        %465 = vmatpush2.msra.mxu0 0.0
        %466 = vmatprep.subr.mxu0 0.0
        %467 = vmatpush2.msra.mxu0 0.0
        %468 = vmatprep.subr.mxu0 0.0
        %469 = vmatpush2.msra.mxu0 0.0
        %470 = vmatprep.subr.mxu0 0.0
        %471 = vmatpush2.msra.mxu0 0.0
        %472 = vmatprep.subr.mxu0 0.0
        %473 = vmatpush2.msra.mxu0 0.0
        %474 = vmatprep.subr.mxu0 0.0
        %475 = vmatpush2.msra.mxu0 0.0
        %476 = vmatprep.subr.mxu0 0.0
        %477 = vmatpush2.msra.mxu0 0.0
        %478 = vmatprep.subr.mxu0 0.0
        %479 = vmatpush2.msra.mxu0 0.0
        %480 = vmatprep.subr.mxu0 0.0
        %481 = vmatpush2.msra.mxu0 0.0
        %482 = vmatprep.subr.mxu0 0.0
        %483 = vmatpush2.msra.mxu0 0.0
        %484 = vmatprep.mubr.f32.mxu0 0.0
        %485 = vmatmul.mubr.f32.gmra.mxu0 %v418
        %v486 = vpop.f32.mrf.mxu0
        %v487 = vadd.f32 0.0, %v486
        %v488 = vpop.f32.mrf.mxu0
        %489 = vdwg.mxu0
        %v490 = vld [vmem:[#allocation8] sm:$0xff]
        %v491 = vld [vmem:[#allocation8 + $0x8] sm:$0xff]
        %v492 = vld [vmem:[#allocation8 + $0x10] sm:$0xff]
        %v493 = vld [vmem:[#allocation8 + $0x18] sm:$0xff]
        %v495 = vsel %vm416, %v410, 0
        %v498 = vsel %vm416, %v411, 0
        %500 = vmatprep.subr.mxu0 0.0
        %501 = vmatpush1.msra.mxu0 0.0
        %502 = vmatprep.subr.mxu0 0.0
        %503 = vmatpush1.msra.mxu0 0.0
        %504 = vmatprep.subr.mxu0 0.0
        %505 = vmatpush1.msra.mxu0 0.0
        %506 = vmatprep.subr.mxu0 0.0
        %507 = vmatpush1.msra.mxu0 0.0
        %508 = vmatprep.subr.mxu0 0.0
        %509 = vmatpush1.msra.mxu0 0.0
        %510 = vmatprep.subr.mxu0 0.0
        %511 = vmatpush1.msra.mxu0 0.0
        %512 = vmatprep.subr.mxu0 0.0
        %513 = vmatpush1.msra.mxu0 0.0
        %514 = vmatprep.subr.mxu0 0.0
        %515 = vmatpush1.msra.mxu0 0.0
        %516 = vmatprep.subr.mxu0 0.0
        %517 = vmatpush1.msra.mxu0 0.0
        %518 = vmatprep.subr.mxu0 0.0
        %519 = vmatpush1.msra.mxu0 0.0
        %520 = vmatprep.subr.mxu0 0.0
        %521 = vmatpush1.msra.mxu0 0.0
        %522 = vmatprep.subr.mxu0 0.0
        %523 = vmatpush1.msra.mxu0 0.0
        %524 = vmatprep.subr.mxu0 0.0
        %525 = vmatpush1.msra.mxu0 %v493
        %526 = vmatprep.subr.mxu0 0.0
        %527 = vmatpush1.msra.mxu0 %v492
        %528 = vmatprep.subr.mxu0 0.0
        %529 = vmatpush1.msra.mxu0 %v491
        %530 = vmatprep.subr.mxu0 0.0
        %531 = vmatpush1.msra.mxu0 %v490
        %532 = vmatprep.subr.mxu0 0.0
        %533 = vmatpush2.msra.mxu0 0.0
        %534 = vmatprep.subr.mxu0 0.0
        %535 = vmatpush2.msra.mxu0 0.0
        %536 = vmatprep.subr.mxu0 0.0
        %537 = vmatpush2.msra.mxu0 0.0
        %538 = vmatprep.subr.mxu0 0.0
        %539 = vmatpush2.msra.mxu0 0.0
        %540 = vmatprep.subr.mxu0 0.0
        %541 = vmatpush2.msra.mxu0 0.0
        %542 = vmatprep.subr.mxu0 0.0
        %543 = vmatpush2.msra.mxu0 0.0
        %544 = vmatprep.subr.mxu0 0.0
        %545 = vmatpush2.msra.mxu0 0.0
        %546 = vmatprep.subr.mxu0 0.0
        %547 = vmatpush2.msra.mxu0 0.0
        %548 = vmatprep.subr.mxu0 0.0
        %549 = vmatpush2.msra.mxu0 0.0
        %550 = vmatprep.subr.mxu0 0.0
        %551 = vmatpush2.msra.mxu0 0.0
        %552 = vmatprep.subr.mxu0 0.0
        %553 = vmatpush2.msra.mxu0 0.0
        %554 = vmatprep.subr.mxu0 0.0
        %555 = vmatpush2.msra.mxu0 0.0
        %556 = vmatprep.subr.mxu0 0.0
        %557 = vmatpush2.msra.mxu0 0.0
        %558 = vmatprep.subr.mxu0 0.0
        %559 = vmatpush2.msra.mxu0 0.0
        %560 = vmatprep.subr.mxu0 0.0
        %561 = vmatpush2.msra.mxu0 0.0
        %562 = vmatprep.subr.mxu0 0.0
        %563 = vmatpush2.msra.mxu0 0.0
        %564 = vmatprep.mubr.f32.mxu0 0.0
        %565 = vmatmul.mubr.f32.gmra.mxu0 %v495
        %v566 = vpop.f32.mrf.mxu0
        %v567 = vadd.f32 0.0, %v566
        %v568 = vpop.f32.mrf.mxu0
        %569 = vmatprep.mubr.f32.mxu0 0.0
        %570 = vmatmul.mubr.f32.gmra.mxu0 %v498
        %v571 = vpop.f32.mrf.mxu0
        %v572 = vadd.f32 0.0, %v571
        %v573 = vpop.f32.mrf.mxu0
        %574 = vdwg.mxu0
        %v575 = vld [vmem:[#allocation10] sm:$0xff]
        %v576 = vld [vmem:[#allocation10 + $0x8] sm:$0xff]
        %v577 = vld [vmem:[#allocation10 + $0x10] sm:$0xff]
        %v578 = vld [vmem:[#allocation10 + $0x18] sm:$0xff]
        %579 = vmatprep.subr.mxu0 0.0
        %580 = vmatpush1.msra.mxu0 0.0
        %581 = vmatprep.subr.mxu0 0.0
        %582 = vmatpush1.msra.mxu0 0.0
        %583 = vmatprep.subr.mxu0 0.0
        %584 = vmatpush1.msra.mxu0 0.0
        %585 = vmatprep.subr.mxu0 0.0
        %586 = vmatpush1.msra.mxu0 0.0
        %587 = vmatprep.subr.mxu0 0.0
        %588 = vmatpush1.msra.mxu0 0.0
        %589 = vmatprep.subr.mxu0 0.0
        %590 = vmatpush1.msra.mxu0 0.0
        %591 = vmatprep.subr.mxu0 0.0
        %592 = vmatpush1.msra.mxu0 0.0
        %593 = vmatprep.subr.mxu0 0.0
        %594 = vmatpush1.msra.mxu0 0.0
        %595 = vmatprep.subr.mxu0 0.0
        %596 = vmatpush1.msra.mxu0 0.0
        %597 = vmatprep.subr.mxu0 0.0
        %598 = vmatpush1.msra.mxu0 0.0
        %599 = vmatprep.subr.mxu0 0.0
        %600 = vmatpush1.msra.mxu0 0.0
        %601 = vmatprep.subr.mxu0 0.0
        %602 = vmatpush1.msra.mxu0 0.0
        %603 = vmatprep.subr.mxu0 0.0
        %604 = vmatpush1.msra.mxu0 %v578
        %605 = vmatprep.subr.mxu0 0.0
        %606 = vmatpush1.msra.mxu0 %v577
        %607 = vmatprep.subr.mxu0 0.0
        %608 = vmatpush1.msra.mxu0 %v576
        %609 = vmatprep.subr.mxu0 0.0
        %610 = vmatpush1.msra.mxu0 %v575
        %611 = vmatprep.subr.mxu0 0.0
        %612 = vmatpush2.msra.mxu0 0.0
        %613 = vmatprep.subr.mxu0 0.0
        %614 = vmatpush2.msra.mxu0 0.0
        %615 = vmatprep.subr.mxu0 0.0
        %616 = vmatpush2.msra.mxu0 0.0
        %617 = vmatprep.subr.mxu0 0.0
        %618 = vmatpush2.msra.mxu0 0.0
        %619 = vmatprep.subr.mxu0 0.0
        %620 = vmatpush2.msra.mxu0 0.0
        %621 = vmatprep.subr.mxu0 0.0
        %622 = vmatpush2.msra.mxu0 0.0
        %623 = vmatprep.subr.mxu0 0.0
        %624 = vmatpush2.msra.mxu0 0.0
        %625 = vmatprep.subr.mxu0 0.0
        %626 = vmatpush2.msra.mxu0 0.0
        %627 = vmatprep.subr.mxu0 0.0
        %628 = vmatpush2.msra.mxu0 0.0
        %629 = vmatprep.subr.mxu0 0.0
        %630 = vmatpush2.msra.mxu0 0.0
        %631 = vmatprep.subr.mxu0 0.0
        %632 = vmatpush2.msra.mxu0 0.0
        %633 = vmatprep.subr.mxu0 0.0
        %634 = vmatpush2.msra.mxu0 0.0
        %635 = vmatprep.subr.mxu0 0.0
        %636 = vmatpush2.msra.mxu0 0.0
        %637 = vmatprep.subr.mxu0 0.0
        %638 = vmatpush2.msra.mxu0 0.0
        %639 = vmatprep.subr.mxu0 0.0
        %640 = vmatpush2.msra.mxu0 0.0
        %641 = vmatprep.subr.mxu0 0.0
        %642 = vmatpush2.msra.mxu0 0.0
        %643 = vmatprep.mubr.f32.mxu0 0.0
        %644 = vmatmul.mubr.f32.gmra.mxu0 %v495
        %v645 = vpop.f32.mrf.mxu0
        %v646 = vadd.f32 0.0, %v645
        %v647 = vpop.f32.mrf.mxu0
        %648 = vmatprep.mubr.f32.mxu0 0.0
        %649 = vmatmul.mubr.f32.gmra.mxu0 %v498
        %v650 = vpop.f32.mrf.mxu0
        %v651 = vadd.f32 0.0, %v650
        %v652 = vpop.f32.mrf.mxu0
        %653 = vdwg.mxu0
        %v654 = vmul.f32 %v487, 0.5
        %vm655 = vcmask 31744
        %v657 = vsel %vm655, %v654, 0
        %v660 = vsel %vm655, %v567, 0
        %v663 = vsel %vm655, %v572, 0
        %665 = vmatprep.subr.mxu0 0.0
        %666 = vmatpush1.xpose.msra.mxu0 0.0
        %667 = vmatprep.subr.mxu0 0.0
        %668 = vmatpush1.xpose.msra.mxu0 0.0
        %669 = vmatprep.subr.mxu0 0.0
        %670 = vmatpush1.xpose.msra.mxu0 0.0
        %671 = vmatprep.subr.mxu0 0.0
        %672 = vmatpush1.xpose.msra.mxu0 0.0
        %673 = vmatprep.subr.mxu0 0.0
        %674 = vmatpush1.xpose.msra.mxu0 0.0
        %675 = vmatprep.subr.mxu0 0.0
        %676 = vmatpush1.xpose.msra.mxu0 0.0
        %677 = vmatprep.subr.mxu0 0.0
        %678 = vmatpush1.xpose.msra.mxu0 0.0
        %679 = vmatprep.subr.mxu0 0.0
        %680 = vmatpush1.xpose.msra.mxu0 0.0
        %681 = vmatprep.subr.mxu0 0.0
        %682 = vmatpush1.xpose.msra.mxu0 0.0
        %683 = vmatprep.subr.mxu0 0.0
        %684 = vmatpush1.xpose.msra.mxu0 0.0
        %685 = vmatprep.subr.mxu0 0.0
        %686 = vmatpush1.xpose.msra.mxu0 0.0
        %687 = vmatprep.subr.mxu0 0.0
        %688 = vmatpush1.xpose.msra.mxu0 0.0
        %689 = vmatprep.subr.mxu0 0.0
        %690 = vmatpush1.xpose.msra.mxu0 0.0
        %691 = vmatprep.subr.mxu0 0.0
        %692 = vmatpush1.xpose.msra.mxu0 0.0
        %693 = vmatprep.subr.mxu0 0.0
        %694 = vmatpush1.xpose.msra.mxu0 %v663
        %695 = vmatprep.subr.mxu0 0.0
        %696 = vmatpush1.xpose.msra.mxu0 %v660
        %697 = vmatprep.subr.mxu0 0.0
        %698 = vmatpush2.xpose.msra.mxu0 0.0
        %699 = vmatprep.subr.mxu0 0.0
        %700 = vmatpush2.xpose.msra.mxu0 0.0
        %701 = vmatprep.subr.mxu0 0.0
        %702 = vmatpush2.xpose.msra.mxu0 0.0
        %703 = vmatprep.subr.mxu0 0.0
        %704 = vmatpush2.xpose.msra.mxu0 0.0
        %705 = vmatprep.subr.mxu0 0.0
        %706 = vmatpush2.xpose.msra.mxu0 0.0
        %707 = vmatprep.subr.mxu0 0.0
        %708 = vmatpush2.xpose.msra.mxu0 0.0
        %709 = vmatprep.subr.mxu0 0.0
        %710 = vmatpush2.xpose.msra.mxu0 0.0
        %711 = vmatprep.subr.mxu0 0.0
        %712 = vmatpush2.xpose.msra.mxu0 0.0
        %713 = vmatprep.subr.mxu0 0.0
        %714 = vmatpush2.xpose.msra.mxu0 0.0
        %715 = vmatprep.subr.mxu0 0.0
        %716 = vmatpush2.xpose.msra.mxu0 0.0
        %717 = vmatprep.subr.mxu0 0.0
        %718 = vmatpush2.xpose.msra.mxu0 0.0
        %719 = vmatprep.subr.mxu0 0.0
        %720 = vmatpush2.xpose.msra.mxu0 0.0
        %721 = vmatprep.subr.mxu0 0.0
        %722 = vmatpush2.xpose.msra.mxu0 0.0
        %723 = vmatprep.subr.mxu0 0.0
        %724 = vmatpush2.xpose.msra.mxu0 0.0
        %725 = vmatprep.subr.mxu0 0.0
        %726 = vmatpush2.xpose.msra.mxu0 0.0
        %727 = vmatprep.subr.mxu0 0.0
        %728 = vmatpush2.xpose.msra.mxu0 0.0
        %729 = vmatprep.mubr.f32.mxu0 0.0
        %730 = vmatmul.mubr.f32.gmra.mxu0 %v657
        %v731 = vpop.f32.mrf.mxu0
        %v732 = vadd.f32 0.0, %v731
        %v733 = vpop.f32.mrf.mxu0
        %734 = vdwg.mxu0
        %vm735 = vcmask 130048
        %v736 = vsel %vm735, %v732, -inf
        %737 = vmax.xlane.f32.xlu0 %v736
        %v738 = vpop.xlane.xlu0 %737
        %v739 = vsub.f32 %v732, %v738
        %v740 = vmul.f32 %v739, 1.442695
        %v741 = vpow.pop %v740
        %v742 = vsel %vm735, %v741, 0.0
        %743 = vadd.xlane.f32.xlu0 %v742
        %v744 = vpop.xlane.xlu0 %743
        %v746 = vsel %vm735, %v741, 0
        %748 = vmatprep.subr.mxu0 0.0
        %749 = vmatpush1.msra.mxu0 0.0
        %750 = vmatprep.subr.mxu0 0.0
        %751 = vmatpush1.msra.mxu0 0.0
        %752 = vmatprep.subr.mxu0 0.0
        %753 = vmatpush1.msra.mxu0 0.0
        %754 = vmatprep.subr.mxu0 0.0
        %755 = vmatpush1.msra.mxu0 0.0
        %756 = vmatprep.subr.mxu0 0.0
        %757 = vmatpush1.msra.mxu0 0.0
        %758 = vmatprep.subr.mxu0 0.0
        %759 = vmatpush1.msra.mxu0 0.0
        %760 = vmatprep.subr.mxu0 0.0
        %761 = vmatpush1.msra.mxu0 0.0
        %762 = vmatprep.subr.mxu0 0.0
        %763 = vmatpush1.msra.mxu0 0.0
        %764 = vmatprep.subr.mxu0 0.0
        %765 = vmatpush1.msra.mxu0 0.0
        %766 = vmatprep.subr.mxu0 0.0
        %767 = vmatpush1.msra.mxu0 0.0
        %768 = vmatprep.subr.mxu0 0.0
        %769 = vmatpush1.msra.mxu0 0.0
        %770 = vmatprep.subr.mxu0 0.0
        %771 = vmatpush1.msra.mxu0 0.0
        %772 = vmatprep.subr.mxu0 0.0
        %773 = vmatpush1.msra.mxu0 0.0
        %774 = vmatprep.subr.mxu0 0.0
        %775 = vmatpush1.msra.mxu0 0.0
        %776 = vmatprep.subr.mxu0 0.0
        %777 = vmatpush1.msra.mxu0 %v651
        %778 = vmatprep.subr.mxu0 0.0
        %779 = vmatpush1.msra.mxu0 %v646
        %780 = vmatprep.subr.mxu0 0.0
        %781 = vmatpush2.msra.mxu0 0.0
        %782 = vmatprep.subr.mxu0 0.0
        %783 = vmatpush2.msra.mxu0 0.0
        %784 = vmatprep.subr.mxu0 0.0
        %785 = vmatpush2.msra.mxu0 0.0
        %786 = vmatprep.subr.mxu0 0.0
        %787 = vmatpush2.msra.mxu0 0.0
        %788 = vmatprep.subr.mxu0 0.0
        %789 = vmatpush2.msra.mxu0 0.0
        %790 = vmatprep.subr.mxu0 0.0
        %791 = vmatpush2.msra.mxu0 0.0
        %792 = vmatprep.subr.mxu0 0.0
        %793 = vmatpush2.msra.mxu0 0.0
        %794 = vmatprep.subr.mxu0 0.0
        %795 = vmatpush2.msra.mxu0 0.0
        %796 = vmatprep.subr.mxu0 0.0
        %797 = vmatpush2.msra.mxu0 0.0
        %798 = vmatprep.subr.mxu0 0.0
        %799 = vmatpush2.msra.mxu0 0.0
        %800 = vmatprep.subr.mxu0 0.0
        %801 = vmatpush2.msra.mxu0 0.0
        %802 = vmatprep.subr.mxu0 0.0
        %803 = vmatpush2.msra.mxu0 0.0
        %804 = vmatprep.subr.mxu0 0.0
        %805 = vmatpush2.msra.mxu0 0.0
        %806 = vmatprep.subr.mxu0 0.0
        %807 = vmatpush2.msra.mxu0 0.0
        %808 = vmatprep.subr.mxu0 0.0
        %809 = vmatpush2.msra.mxu0 0.0
        %810 = vmatprep.subr.mxu0 0.0
        %811 = vmatpush2.msra.mxu0 0.0
        %812 = vmatprep.mubr.f32.mxu0 0.0
        %813 = vmatmul.mubr.f32.gmra.mxu0 %v746
        %v814 = vpop.f32.mrf.mxu0
        %v815 = vadd.f32 0.0, %v814
        %v816 = vpop.f32.mrf.mxu0
        %817 = vdwg.mxu0
        %v818 = vrcp.pop %v744
        %v819 = vmul.f32 %v815, %v818
        %820 = vrot.lane.b32.xlu0 %v654, 124
        %v821 = vpop.permute.xlu0 %820
        %822 = vrot.lane.b32.xlu0 %v567, 124
        %v823 = vpop.permute.xlu0 %822
        %824 = vrot.lane.b32.xlu0 %v572, 124
        %v825 = vpop.permute.xlu0 %824
        %v826 = vsel %vm655, %v821, 0
        %v828 = vsel %vm655, %v823, 0
        %v830 = vsel %vm655, %v825, 0
        %832 = vmatprep.subr.mxu0 0.0
        %833 = vmatpush1.xpose.msra.mxu0 0.0
        %834 = vmatprep.subr.mxu0 0.0
        %835 = vmatpush1.xpose.msra.mxu0 0.0
        %836 = vmatprep.subr.mxu0 0.0
        %837 = vmatpush1.xpose.msra.mxu0 0.0
        %838 = vmatprep.subr.mxu0 0.0
        %839 = vmatpush1.xpose.msra.mxu0 0.0
        %840 = vmatprep.subr.mxu0 0.0
        %841 = vmatpush1.xpose.msra.mxu0 0.0
        %842 = vmatprep.subr.mxu0 0.0
        %843 = vmatpush1.xpose.msra.mxu0 0.0
        %844 = vmatprep.subr.mxu0 0.0
        %845 = vmatpush1.xpose.msra.mxu0 0.0
        %846 = vmatprep.subr.mxu0 0.0
        %847 = vmatpush1.xpose.msra.mxu0 0.0
        %848 = vmatprep.subr.mxu0 0.0
        %849 = vmatpush1.xpose.msra.mxu0 0.0
        %850 = vmatprep.subr.mxu0 0.0
        %851 = vmatpush1.xpose.msra.mxu0 0.0
        %852 = vmatprep.subr.mxu0 0.0
        %853 = vmatpush1.xpose.msra.mxu0 0.0
        %854 = vmatprep.subr.mxu0 0.0
        %855 = vmatpush1.xpose.msra.mxu0 0.0
        %856 = vmatprep.subr.mxu0 0.0
        %857 = vmatpush1.xpose.msra.mxu0 0.0
        %858 = vmatprep.subr.mxu0 0.0
        %859 = vmatpush1.xpose.msra.mxu0 0.0
        %860 = vmatprep.subr.mxu0 0.0
        %861 = vmatpush1.xpose.msra.mxu0 %v830
        %862 = vmatprep.subr.mxu0 0.0
        %863 = vmatpush1.xpose.msra.mxu0 %v828
        %864 = vmatprep.subr.mxu0 0.0
        %865 = vmatpush2.xpose.msra.mxu0 0.0
        %866 = vmatprep.subr.mxu0 0.0
        %867 = vmatpush2.xpose.msra.mxu0 0.0
        %868 = vmatprep.subr.mxu0 0.0
        %869 = vmatpush2.xpose.msra.mxu0 0.0
        %870 = vmatprep.subr.mxu0 0.0
        %871 = vmatpush2.xpose.msra.mxu0 0.0
        %872 = vmatprep.subr.mxu0 0.0
        %873 = vmatpush2.xpose.msra.mxu0 0.0
        %874 = vmatprep.subr.mxu0 0.0
        %875 = vmatpush2.xpose.msra.mxu0 0.0
        %876 = vmatprep.subr.mxu0 0.0
        %877 = vmatpush2.xpose.msra.mxu0 0.0
        %878 = vmatprep.subr.mxu0 0.0
        %879 = vmatpush2.xpose.msra.mxu0 0.0
        %880 = vmatprep.subr.mxu0 0.0
        %881 = vmatpush2.xpose.msra.mxu0 0.0
        %882 = vmatprep.subr.mxu0 0.0
        %883 = vmatpush2.xpose.msra.mxu0 0.0
        %884 = vmatprep.subr.mxu0 0.0
        %885 = vmatpush2.xpose.msra.mxu0 0.0
        %886 = vmatprep.subr.mxu0 0.0
        %887 = vmatpush2.xpose.msra.mxu0 0.0
        %888 = vmatprep.subr.mxu0 0.0
        %889 = vmatpush2.xpose.msra.mxu0 0.0
        %890 = vmatprep.subr.mxu0 0.0
        %891 = vmatpush2.xpose.msra.mxu0 0.0
        %892 = vmatprep.subr.mxu0 0.0
        %893 = vmatpush2.xpose.msra.mxu0 0.0
        %894 = vmatprep.subr.mxu0 0.0
        %895 = vmatpush2.xpose.msra.mxu0 0.0
        %896 = vmatprep.mubr.f32.mxu0 0.0
        %897 = vmatmul.mubr.f32.gmra.mxu0 %v826
        %v898 = vpop.f32.mrf.mxu0
        %v899 = vadd.f32 0.0, %v898
        %v900 = vpop.f32.mrf.mxu0
        %901 = vdwg.mxu0
        %v902 = vsel %vm735, %v899, -inf
        %903 = vmax.xlane.f32.xlu0 %v902
        %v904 = vpop.xlane.xlu0 %903
        %v905 = vsub.f32 %v899, %v904
        %v906 = vmul.f32 %v905, 1.442695
        %v907 = vpow.pop %v906
        %v908 = vsel %vm735, %v907, 0.0
        %909 = vadd.xlane.f32.xlu0 %v908
        %v910 = vpop.xlane.xlu0 %909
        %913 = vrot.lane.b32.xlu0 %v646, 124
        %v914 = vpop.permute.xlu0 %913
        %915 = vrot.lane.b32.xlu0 %v651, 124
        %v916 = vpop.permute.xlu0 %915
        %v920 = vsel %vm735, %v907, 0
        %922 = vmatprep.subr.mxu0 0.0
        %923 = vmatpush1.msra.mxu0 0.0
        %924 = vmatprep.subr.mxu0 0.0
        %925 = vmatpush1.msra.mxu0 0.0
        %926 = vmatprep.subr.mxu0 0.0
        %927 = vmatpush1.msra.mxu0 0.0
        %928 = vmatprep.subr.mxu0 0.0
        %929 = vmatpush1.msra.mxu0 0.0
        %930 = vmatprep.subr.mxu0 0.0
        %931 = vmatpush1.msra.mxu0 0.0
        %932 = vmatprep.subr.mxu0 0.0
        %933 = vmatpush1.msra.mxu0 0.0
        %934 = vmatprep.subr.mxu0 0.0
        %935 = vmatpush1.msra.mxu0 0.0
        %936 = vmatprep.subr.mxu0 0.0
        %937 = vmatpush1.msra.mxu0 0.0
        %938 = vmatprep.subr.mxu0 0.0
        %939 = vmatpush1.msra.mxu0 0.0
        %940 = vmatprep.subr.mxu0 0.0
        %941 = vmatpush1.msra.mxu0 0.0
        %942 = vmatprep.subr.mxu0 0.0
        %943 = vmatpush1.msra.mxu0 0.0
        %944 = vmatprep.subr.mxu0 0.0
        %945 = vmatpush1.msra.mxu0 0.0
        %946 = vmatprep.subr.mxu0 0.0
        %947 = vmatpush1.msra.mxu0 0.0
        %948 = vmatprep.subr.mxu0 0.0
        %949 = vmatpush1.msra.mxu0 0.0
        %950 = vmatprep.subr.mxu0 0.0
        %951 = vmatpush1.msra.mxu0 %v916
        %952 = vmatprep.subr.mxu0 0.0
        %953 = vmatpush1.msra.mxu0 %v914
        %954 = vmatprep.subr.mxu0 0.0
        %955 = vmatpush2.msra.mxu0 0.0
        %956 = vmatprep.subr.mxu0 0.0
        %957 = vmatpush2.msra.mxu0 0.0
        %958 = vmatprep.subr.mxu0 0.0
        %959 = vmatpush2.msra.mxu0 0.0
        %960 = vmatprep.subr.mxu0 0.0
        %961 = vmatpush2.msra.mxu0 0.0
        %962 = vmatprep.subr.mxu0 0.0
        %963 = vmatpush2.msra.mxu0 0.0
        %964 = vmatprep.subr.mxu0 0.0
        %965 = vmatpush2.msra.mxu0 0.0
        %966 = vmatprep.subr.mxu0 0.0
        %967 = vmatpush2.msra.mxu0 0.0
        %968 = vmatprep.subr.mxu0 0.0
        %969 = vmatpush2.msra.mxu0 0.0
        %970 = vmatprep.subr.mxu0 0.0
        %971 = vmatpush2.msra.mxu0 0.0
        %972 = vmatprep.subr.mxu0 0.0
        %973 = vmatpush2.msra.mxu0 0.0
        %974 = vmatprep.subr.mxu0 0.0
        %975 = vmatpush2.msra.mxu0 0.0
        %976 = vmatprep.subr.mxu0 0.0
        %977 = vmatpush2.msra.mxu0 0.0
        %978 = vmatprep.subr.mxu0 0.0
        %979 = vmatpush2.msra.mxu0 0.0
        %980 = vmatprep.subr.mxu0 0.0
        %981 = vmatpush2.msra.mxu0 0.0
        %982 = vmatprep.subr.mxu0 0.0
        %983 = vmatpush2.msra.mxu0 0.0
        %984 = vmatprep.subr.mxu0 0.0
        %985 = vmatpush2.msra.mxu0 0.0
        %986 = vmatprep.mubr.f32.mxu0 0.0
        %987 = vmatmul.mubr.f32.gmra.mxu0 %v920
        %v988 = vpop.f32.mrf.mxu0
        %v989 = vadd.f32 0.0, %v988
        %v990 = vpop.f32.mrf.mxu0
        %991 = vdwg.mxu0
        %v992 = vrcp.pop %v910
        %v993 = vmul.f32 %v989, %v992
        %994 = vrot.lane.b32.xlu0 %v654, 120
        %v995 = vpop.permute.xlu0 %994
        %996 = vrot.lane.b32.xlu0 %v567, 120
        %v997 = vpop.permute.xlu0 %996
        %998 = vrot.lane.b32.xlu0 %v572, 120
        %v999 = vpop.permute.xlu0 %998
        %v1000 = vsel %vm655, %v995, 0
        %v1002 = vsel %vm655, %v997, 0
        %v1004 = vsel %vm655, %v999, 0
        %1006 = vmatprep.subr.mxu0 0.0
        %1007 = vmatpush1.xpose.msra.mxu0 0.0
        %1008 = vmatprep.subr.mxu0 0.0
        %1009 = vmatpush1.xpose.msra.mxu0 0.0
        %1010 = vmatprep.subr.mxu0 0.0
        %1011 = vmatpush1.xpose.msra.mxu0 0.0
        %1012 = vmatprep.subr.mxu0 0.0
        %1013 = vmatpush1.xpose.msra.mxu0 0.0
        %1014 = vmatprep.subr.mxu0 0.0
        %1015 = vmatpush1.xpose.msra.mxu0 0.0
        %1016 = vmatprep.subr.mxu0 0.0
        %1017 = vmatpush1.xpose.msra.mxu0 0.0
        %1018 = vmatprep.subr.mxu0 0.0
        %1019 = vmatpush1.xpose.msra.mxu0 0.0
        %1020 = vmatprep.subr.mxu0 0.0
        %1021 = vmatpush1.xpose.msra.mxu0 0.0
        %1022 = vmatprep.subr.mxu0 0.0
        %1023 = vmatpush1.xpose.msra.mxu0 0.0
        %1024 = vmatprep.subr.mxu0 0.0
        %1025 = vmatpush1.xpose.msra.mxu0 0.0
        %1026 = vmatprep.subr.mxu0 0.0
        %1027 = vmatpush1.xpose.msra.mxu0 0.0
        %1028 = vmatprep.subr.mxu0 0.0
        %1029 = vmatpush1.xpose.msra.mxu0 0.0
        %1030 = vmatprep.subr.mxu0 0.0
        %1031 = vmatpush1.xpose.msra.mxu0 0.0
        %1032 = vmatprep.subr.mxu0 0.0
        %1033 = vmatpush1.xpose.msra.mxu0 0.0
        %1034 = vmatprep.subr.mxu0 0.0
        %1035 = vmatpush1.xpose.msra.mxu0 %v1004
        %1036 = vmatprep.subr.mxu0 0.0
        %1037 = vmatpush1.xpose.msra.mxu0 %v1002
        %1038 = vmatprep.subr.mxu0 0.0
        %1039 = vmatpush2.xpose.msra.mxu0 0.0
        %1040 = vmatprep.subr.mxu0 0.0
        %1041 = vmatpush2.xpose.msra.mxu0 0.0
        %1042 = vmatprep.subr.mxu0 0.0
        %1043 = vmatpush2.xpose.msra.mxu0 0.0
        %1044 = vmatprep.subr.mxu0 0.0
        %1045 = vmatpush2.xpose.msra.mxu0 0.0
        %1046 = vmatprep.subr.mxu0 0.0
        %1047 = vmatpush2.xpose.msra.mxu0 0.0
        %1048 = vmatprep.subr.mxu0 0.0
        %1049 = vmatpush2.xpose.msra.mxu0 0.0
        %1050 = vmatprep.subr.mxu0 0.0
        %1051 = vmatpush2.xpose.msra.mxu0 0.0
        %1052 = vmatprep.subr.mxu0 0.0
        %1053 = vmatpush2.xpose.msra.mxu0 0.0
        %1054 = vmatprep.subr.mxu0 0.0
        %1055 = vmatpush2.xpose.msra.mxu0 0.0
        %1056 = vmatprep.subr.mxu0 0.0
        %1057 = vmatpush2.xpose.msra.mxu0 0.0
        %1058 = vmatprep.subr.mxu0 0.0
        %1059 = vmatpush2.xpose.msra.mxu0 0.0
        %1060 = vmatprep.subr.mxu0 0.0
        %1061 = vmatpush2.xpose.msra.mxu0 0.0
        %1062 = vmatprep.subr.mxu0 0.0
        %1063 = vmatpush2.xpose.msra.mxu0 0.0
        %1064 = vmatprep.subr.mxu0 0.0
        %1065 = vmatpush2.xpose.msra.mxu0 0.0
        %1066 = vmatprep.subr.mxu0 0.0
        %1067 = vmatpush2.xpose.msra.mxu0 0.0
        %1068 = vmatprep.subr.mxu0 0.0
        %1069 = vmatpush2.xpose.msra.mxu0 0.0
        %1070 = vmatprep.mubr.f32.mxu0 0.0
        %1071 = vmatmul.mubr.f32.gmra.mxu0 %v1000
        %v1072 = vpop.f32.mrf.mxu0
        %v1073 = vadd.f32 0.0, %v1072
        %v1074 = vpop.f32.mrf.mxu0
        %1075 = vdwg.mxu0
        %v1076 = vsel %vm735, %v1073, -inf
        %1077 = vmax.xlane.f32.xlu0 %v1076
        %v1078 = vpop.xlane.xlu0 %1077
        %v1079 = vsub.f32 %v1073, %v1078
        %v1080 = vmul.f32 %v1079, 1.442695
        %v1081 = vpow.pop %v1080
        %v1082 = vsel %vm735, %v1081, 0.0
        %1083 = vadd.xlane.f32.xlu0 %v1082
        %v1084 = vpop.xlane.xlu0 %1083
        %1085 = vrot.lane.b32.xlu0 %v646, 120
        %v1086 = vpop.permute.xlu0 %1085
        %1087 = vrot.lane.b32.xlu0 %v651, 120
        %v1088 = vpop.permute.xlu0 %1087
        %v1092 = vsel %vm735, %v1081, 0
        %1094 = vmatprep.subr.mxu0 0.0
        %1095 = vmatpush1.msra.mxu0 0.0
        %1096 = vmatprep.subr.mxu0 0.0
        %1097 = vmatpush1.msra.mxu0 0.0
        %1098 = vmatprep.subr.mxu0 0.0
        %1099 = vmatpush1.msra.mxu0 0.0
        %1100 = vmatprep.subr.mxu0 0.0
        %1101 = vmatpush1.msra.mxu0 0.0
        %1102 = vmatprep.subr.mxu0 0.0
        %1103 = vmatpush1.msra.mxu0 0.0
        %1104 = vmatprep.subr.mxu0 0.0
        %1105 = vmatpush1.msra.mxu0 0.0
        %1106 = vmatprep.subr.mxu0 0.0
        %1107 = vmatpush1.msra.mxu0 0.0
        %1108 = vmatprep.subr.mxu0 0.0
        %1109 = vmatpush1.msra.mxu0 0.0
        %1110 = vmatprep.subr.mxu0 0.0
        %1111 = vmatpush1.msra.mxu0 0.0
        %1112 = vmatprep.subr.mxu0 0.0
        %1113 = vmatpush1.msra.mxu0 0.0
        %1114 = vmatprep.subr.mxu0 0.0
        %1115 = vmatpush1.msra.mxu0 0.0
        %1116 = vmatprep.subr.mxu0 0.0
        %1117 = vmatpush1.msra.mxu0 0.0
        %1118 = vmatprep.subr.mxu0 0.0
        %1119 = vmatpush1.msra.mxu0 0.0
        %1120 = vmatprep.subr.mxu0 0.0
        %1121 = vmatpush1.msra.mxu0 0.0
        %1122 = vmatprep.subr.mxu0 0.0
        %1123 = vmatpush1.msra.mxu0 %v1088
        %1124 = vmatprep.subr.mxu0 0.0
        %1125 = vmatpush1.msra.mxu0 %v1086
        %1126 = vmatprep.subr.mxu0 0.0
        %1127 = vmatpush2.msra.mxu0 0.0
        %1128 = vmatprep.subr.mxu0 0.0
        %1129 = vmatpush2.msra.mxu0 0.0
        %1130 = vmatprep.subr.mxu0 0.0
        %1131 = vmatpush2.msra.mxu0 0.0
        %1132 = vmatprep.subr.mxu0 0.0
        %1133 = vmatpush2.msra.mxu0 0.0
        %1134 = vmatprep.subr.mxu0 0.0
        %1135 = vmatpush2.msra.mxu0 0.0
        %1136 = vmatprep.subr.mxu0 0.0
        %1137 = vmatpush2.msra.mxu0 0.0
        %1138 = vmatprep.subr.mxu0 0.0
        %1139 = vmatpush2.msra.mxu0 0.0
        %1140 = vmatprep.subr.mxu0 0.0
        %1141 = vmatpush2.msra.mxu0 0.0
        %1142 = vmatprep.subr.mxu0 0.0
        %1143 = vmatpush2.msra.mxu0 0.0
        %1144 = vmatprep.subr.mxu0 0.0
        %1145 = vmatpush2.msra.mxu0 0.0
        %1146 = vmatprep.subr.mxu0 0.0
        %1147 = vmatpush2.msra.mxu0 0.0
        %1148 = vmatprep.subr.mxu0 0.0
        %1149 = vmatpush2.msra.mxu0 0.0
        %1150 = vmatprep.subr.mxu0 0.0
        %1151 = vmatpush2.msra.mxu0 0.0
        %1152 = vmatprep.subr.mxu0 0.0
        %1153 = vmatpush2.msra.mxu0 0.0
        %1154 = vmatprep.subr.mxu0 0.0
        %1155 = vmatpush2.msra.mxu0 0.0
        %1156 = vmatprep.subr.mxu0 0.0
        %1157 = vmatpush2.msra.mxu0 0.0
        %1158 = vmatprep.mubr.f32.mxu0 0.0
        %1159 = vmatmul.mubr.f32.gmra.mxu0 %v1092
        %v1160 = vpop.f32.mrf.mxu0
        %v1161 = vadd.f32 0.0, %v1160
        %v1162 = vpop.f32.mrf.mxu0
        %1163 = vdwg.mxu0
        %v1164 = vrcp.pop %v1084
        %v1165 = vmul.f32 %v1161, %v1164
        %1166 = vrot.lane.b32.xlu0 %v654, 116
        %v1167 = vpop.permute.xlu0 %1166
        %1168 = vrot.lane.b32.xlu0 %v567, 116
        %v1169 = vpop.permute.xlu0 %1168
        %1170 = vrot.lane.b32.xlu0 %v572, 116
        %v1171 = vpop.permute.xlu0 %1170
        %v1172 = vsel %vm655, %v1167, 0
        %v1174 = vsel %vm655, %v1169, 0
        %v1176 = vsel %vm655, %v1171, 0
        %1178 = vmatprep.subr.mxu0 0.0
        %1179 = vmatpush1.xpose.msra.mxu0 0.0
        %1180 = vmatprep.subr.mxu0 0.0
        %1181 = vmatpush1.xpose.msra.mxu0 0.0
        %1182 = vmatprep.subr.mxu0 0.0
        %1183 = vmatpush1.xpose.msra.mxu0 0.0
        %1184 = vmatprep.subr.mxu0 0.0
        %1185 = vmatpush1.xpose.msra.mxu0 0.0
        %1186 = vmatprep.subr.mxu0 0.0
        %1187 = vmatpush1.xpose.msra.mxu0 0.0
        %1188 = vmatprep.subr.mxu0 0.0
        %1189 = vmatpush1.xpose.msra.mxu0 0.0
        %1190 = vmatprep.subr.mxu0 0.0
        %1191 = vmatpush1.xpose.msra.mxu0 0.0
        %1192 = vmatprep.subr.mxu0 0.0
        %1193 = vmatpush1.xpose.msra.mxu0 0.0
        %1194 = vmatprep.subr.mxu0 0.0
        %1195 = vmatpush1.xpose.msra.mxu0 0.0
        %1196 = vmatprep.subr.mxu0 0.0
        %1197 = vmatpush1.xpose.msra.mxu0 0.0
        %1198 = vmatprep.subr.mxu0 0.0
        %1199 = vmatpush1.xpose.msra.mxu0 0.0
        %1200 = vmatprep.subr.mxu0 0.0
        %1201 = vmatpush1.xpose.msra.mxu0 0.0
        %1202 = vmatprep.subr.mxu0 0.0
        %1203 = vmatpush1.xpose.msra.mxu0 0.0
        %1204 = vmatprep.subr.mxu0 0.0
        %1205 = vmatpush1.xpose.msra.mxu0 0.0
        %1206 = vmatprep.subr.mxu0 0.0
        %1207 = vmatpush1.xpose.msra.mxu0 %v1176
        %1208 = vmatprep.subr.mxu0 0.0
        %1209 = vmatpush1.xpose.msra.mxu0 %v1174
        %1210 = vmatprep.subr.mxu0 0.0
        %1211 = vmatpush2.xpose.msra.mxu0 0.0
        %1212 = vmatprep.subr.mxu0 0.0
        %1213 = vmatpush2.xpose.msra.mxu0 0.0
        %1214 = vmatprep.subr.mxu0 0.0
        %1215 = vmatpush2.xpose.msra.mxu0 0.0
        %1216 = vmatprep.subr.mxu0 0.0
        %1217 = vmatpush2.xpose.msra.mxu0 0.0
        %1218 = vmatprep.subr.mxu0 0.0
        %1219 = vmatpush2.xpose.msra.mxu0 0.0
        %1220 = vmatprep.subr.mxu0 0.0
        %1221 = vmatpush2.xpose.msra.mxu0 0.0
        %1222 = vmatprep.subr.mxu0 0.0
        %1223 = vmatpush2.xpose.msra.mxu0 0.0
        %1224 = vmatprep.subr.mxu0 0.0
        %1225 = vmatpush2.xpose.msra.mxu0 0.0
        %1226 = vmatprep.subr.mxu0 0.0
        %1227 = vmatpush2.xpose.msra.mxu0 0.0
        %1228 = vmatprep.subr.mxu0 0.0
        %1229 = vmatpush2.xpose.msra.mxu0 0.0
        %1230 = vmatprep.subr.mxu0 0.0
        %1231 = vmatpush2.xpose.msra.mxu0 0.0
        %1232 = vmatprep.subr.mxu0 0.0
        %1233 = vmatpush2.xpose.msra.mxu0 0.0
        %1234 = vmatprep.subr.mxu0 0.0
        %1235 = vmatpush2.xpose.msra.mxu0 0.0
        %1236 = vmatprep.subr.mxu0 0.0
        %1237 = vmatpush2.xpose.msra.mxu0 0.0
        %1238 = vmatprep.subr.mxu0 0.0
        %1239 = vmatpush2.xpose.msra.mxu0 0.0
        %1240 = vmatprep.subr.mxu0 0.0
        %1241 = vmatpush2.xpose.msra.mxu0 0.0
        %1242 = vmatprep.mubr.f32.mxu0 0.0
        %1243 = vmatmul.mubr.f32.gmra.mxu0 %v1172
        %v1244 = vpop.f32.mrf.mxu0
        %v1245 = vadd.f32 0.0, %v1244
        %v1246 = vpop.f32.mrf.mxu0
        %1247 = vdwg.mxu0
        %v1248 = vsel %vm735, %v1245, -inf
        %1249 = vmax.xlane.f32.xlu0 %v1248
        %v1250 = vpop.xlane.xlu0 %1249
        %v1251 = vsub.f32 %v1245, %v1250
        %v1252 = vmul.f32 %v1251, 1.442695
        %v1253 = vpow.pop %v1252
        %v1254 = vsel %vm735, %v1253, 0.0
        %1255 = vadd.xlane.f32.xlu0 %v1254
        %v1256 = vpop.xlane.xlu0 %1255
        %1257 = vrot.lane.b32.xlu0 %v646, 116
        %v1258 = vpop.permute.xlu0 %1257
        %1259 = vrot.lane.b32.xlu0 %v651, 116
        %v1260 = vpop.permute.xlu0 %1259
        %v1264 = vsel %vm735, %v1253, 0
        %1266 = vmatprep.subr.mxu0 0.0
        %1267 = vmatpush1.msra.mxu0 0.0
        %1268 = vmatprep.subr.mxu0 0.0
        %1269 = vmatpush1.msra.mxu0 0.0
        %1270 = vmatprep.subr.mxu0 0.0
        %1271 = vmatpush1.msra.mxu0 0.0
        %1272 = vmatprep.subr.mxu0 0.0
        %1273 = vmatpush1.msra.mxu0 0.0
        %1274 = vmatprep.subr.mxu0 0.0
        %1275 = vmatpush1.msra.mxu0 0.0
        %1276 = vmatprep.subr.mxu0 0.0
        %1277 = vmatpush1.msra.mxu0 0.0
        %1278 = vmatprep.subr.mxu0 0.0
        %1279 = vmatpush1.msra.mxu0 0.0
        %1280 = vmatprep.subr.mxu0 0.0
        %1281 = vmatpush1.msra.mxu0 0.0
        %1282 = vmatprep.subr.mxu0 0.0
        %1283 = vmatpush1.msra.mxu0 0.0
        %1284 = vmatprep.subr.mxu0 0.0
        %1285 = vmatpush1.msra.mxu0 0.0
        %1286 = vmatprep.subr.mxu0 0.0
        %1287 = vmatpush1.msra.mxu0 0.0
        %1288 = vmatprep.subr.mxu0 0.0
        %1289 = vmatpush1.msra.mxu0 0.0
        %1290 = vmatprep.subr.mxu0 0.0
        %1291 = vmatpush1.msra.mxu0 0.0
        %1292 = vmatprep.subr.mxu0 0.0
        %1293 = vmatpush1.msra.mxu0 0.0
        %1294 = vmatprep.subr.mxu0 0.0
        %1295 = vmatpush1.msra.mxu0 %v1260
        %1296 = vmatprep.subr.mxu0 0.0
        %1297 = vmatpush1.msra.mxu0 %v1258
        %1298 = vmatprep.subr.mxu0 0.0
        %1299 = vmatpush2.msra.mxu0 0.0
        %1300 = vmatprep.subr.mxu0 0.0
        %1301 = vmatpush2.msra.mxu0 0.0
        %1302 = vmatprep.subr.mxu0 0.0
        %1303 = vmatpush2.msra.mxu0 0.0
        %1304 = vmatprep.subr.mxu0 0.0
        %1305 = vmatpush2.msra.mxu0 0.0
        %1306 = vmatprep.subr.mxu0 0.0
        %1307 = vmatpush2.msra.mxu0 0.0
        %1308 = vmatprep.subr.mxu0 0.0
        %1309 = vmatpush2.msra.mxu0 0.0
        %1310 = vmatprep.subr.mxu0 0.0
        %1311 = vmatpush2.msra.mxu0 0.0
        %1312 = vmatprep.subr.mxu0 0.0
        %1313 = vmatpush2.msra.mxu0 0.0
        %1314 = vmatprep.subr.mxu0 0.0
        %1315 = vmatpush2.msra.mxu0 0.0
        %1316 = vmatprep.subr.mxu0 0.0
        %1317 = vmatpush2.msra.mxu0 0.0
        %1318 = vmatprep.subr.mxu0 0.0
        %1319 = vmatpush2.msra.mxu0 0.0
        %1320 = vmatprep.subr.mxu0 0.0
        %1321 = vmatpush2.msra.mxu0 0.0
        %1322 = vmatprep.subr.mxu0 0.0
        %1323 = vmatpush2.msra.mxu0 0.0
        %1324 = vmatprep.subr.mxu0 0.0
        %1325 = vmatpush2.msra.mxu0 0.0
        %1326 = vmatprep.subr.mxu0 0.0
        %1327 = vmatpush2.msra.mxu0 0.0
        %1328 = vmatprep.subr.mxu0 0.0
        %1329 = vmatpush2.msra.mxu0 0.0
        %1330 = vmatprep.mubr.f32.mxu0 0.0
        %1331 = vmatmul.mubr.f32.gmra.mxu0 %v1264
        %v1332 = vpop.f32.mrf.mxu0
        %v1333 = vadd.f32 0.0, %v1332
        %v1334 = vpop.f32.mrf.mxu0
        %1335 = vdwg.mxu0
        %v1336 = vrcp.pop %v1256
        %v1337 = vmul.f32 %v1333, %v1336
        %1338 = vrot.lane.b32.xlu0 %v654, 112
        %v1339 = vpop.permute.xlu0 %1338
        %1340 = vrot.lane.b32.xlu0 %v567, 112
        %v1341 = vpop.permute.xlu0 %1340
        %1342 = vrot.lane.b32.xlu0 %v572, 112
        %v1343 = vpop.permute.xlu0 %1342
        %v1344 = vsel %vm655, %v1339, 0
        %v1346 = vsel %vm655, %v1341, 0
        %v1348 = vsel %vm655, %v1343, 0
        %1350 = vmatprep.subr.mxu0 0.0
        %1351 = vmatpush1.xpose.msra.mxu0 0.0
        %1352 = vmatprep.subr.mxu0 0.0
        %1353 = vmatpush1.xpose.msra.mxu0 0.0
        %1354 = vmatprep.subr.mxu0 0.0
        %1355 = vmatpush1.xpose.msra.mxu0 0.0
        %1356 = vmatprep.subr.mxu0 0.0
        %1357 = vmatpush1.xpose.msra.mxu0 0.0
        %1358 = vmatprep.subr.mxu0 0.0
        %1359 = vmatpush1.xpose.msra.mxu0 0.0
        %1360 = vmatprep.subr.mxu0 0.0
        %1361 = vmatpush1.xpose.msra.mxu0 0.0
        %1362 = vmatprep.subr.mxu0 0.0
        %1363 = vmatpush1.xpose.msra.mxu0 0.0
        %1364 = vmatprep.subr.mxu0 0.0
        %1365 = vmatpush1.xpose.msra.mxu0 0.0
        %1366 = vmatprep.subr.mxu0 0.0
        %1367 = vmatpush1.xpose.msra.mxu0 0.0
        %1368 = vmatprep.subr.mxu0 0.0
        %1369 = vmatpush1.xpose.msra.mxu0 0.0
        %1370 = vmatprep.subr.mxu0 0.0
        %1371 = vmatpush1.xpose.msra.mxu0 0.0
        %1372 = vmatprep.subr.mxu0 0.0
        %1373 = vmatpush1.xpose.msra.mxu0 0.0
        %1374 = vmatprep.subr.mxu0 0.0
        %1375 = vmatpush1.xpose.msra.mxu0 0.0
        %1376 = vmatprep.subr.mxu0 0.0
        %1377 = vmatpush1.xpose.msra.mxu0 0.0
        %1378 = vmatprep.subr.mxu0 0.0
        %1379 = vmatpush1.xpose.msra.mxu0 %v1348
        %1380 = vmatprep.subr.mxu0 0.0
        %1381 = vmatpush1.xpose.msra.mxu0 %v1346
        %1382 = vmatprep.subr.mxu0 0.0
        %1383 = vmatpush2.xpose.msra.mxu0 0.0
        %1384 = vmatprep.subr.mxu0 0.0
        %1385 = vmatpush2.xpose.msra.mxu0 0.0
        %1386 = vmatprep.subr.mxu0 0.0
        %1387 = vmatpush2.xpose.msra.mxu0 0.0
        %1388 = vmatprep.subr.mxu0 0.0
        %1389 = vmatpush2.xpose.msra.mxu0 0.0
        %1390 = vmatprep.subr.mxu0 0.0
        %1391 = vmatpush2.xpose.msra.mxu0 0.0
        %1392 = vmatprep.subr.mxu0 0.0
        %1393 = vmatpush2.xpose.msra.mxu0 0.0
        %1394 = vmatprep.subr.mxu0 0.0
        %1395 = vmatpush2.xpose.msra.mxu0 0.0
        %1396 = vmatprep.subr.mxu0 0.0
        %1397 = vmatpush2.xpose.msra.mxu0 0.0
        %1398 = vmatprep.subr.mxu0 0.0
        %1399 = vmatpush2.xpose.msra.mxu0 0.0
        %1400 = vmatprep.subr.mxu0 0.0
        %1401 = vmatpush2.xpose.msra.mxu0 0.0
        %1402 = vmatprep.subr.mxu0 0.0
        %1403 = vmatpush2.xpose.msra.mxu0 0.0
        %1404 = vmatprep.subr.mxu0 0.0
        %1405 = vmatpush2.xpose.msra.mxu0 0.0
        %1406 = vmatprep.subr.mxu0 0.0
        %1407 = vmatpush2.xpose.msra.mxu0 0.0
        %1408 = vmatprep.subr.mxu0 0.0
        %1409 = vmatpush2.xpose.msra.mxu0 0.0
        %1410 = vmatprep.subr.mxu0 0.0
        %1411 = vmatpush2.xpose.msra.mxu0 0.0
        %1412 = vmatprep.subr.mxu0 0.0
        %1413 = vmatpush2.xpose.msra.mxu0 0.0
        %1414 = vmatprep.mubr.f32.mxu0 0.0
        %1415 = vmatmul.mubr.f32.gmra.mxu0 %v1344
        %v1416 = vpop.f32.mrf.mxu0
        %v1417 = vadd.f32 0.0, %v1416
        %v1418 = vpop.f32.mrf.mxu0
        %1419 = vdwg.mxu0
        %v1420 = vsel %vm735, %v1417, -inf
        %1421 = vmax.xlane.f32.xlu0 %v1420
        %v1422 = vpop.xlane.xlu0 %1421
        %v1423 = vsub.f32 %v1417, %v1422
        %v1424 = vmul.f32 %v1423, 1.442695
        %v1425 = vpow.pop %v1424
        %v1426 = vsel %vm735, %v1425, 0.0
        %1427 = vadd.xlane.f32.xlu0 %v1426
        %v1428 = vpop.xlane.xlu0 %1427
        %1429 = vrot.lane.b32.xlu0 %v646, 112
        %v1430 = vpop.permute.xlu0 %1429
        %1431 = vrot.lane.b32.xlu0 %v651, 112
        %v1432 = vpop.permute.xlu0 %1431
        %v1436 = vsel %vm735, %v1425, 0
        %1438 = vmatprep.subr.mxu0 0.0
        %1439 = vmatpush1.msra.mxu0 0.0
        %1440 = vmatprep.subr.mxu0 0.0
        %1441 = vmatpush1.msra.mxu0 0.0
        %1442 = vmatprep.subr.mxu0 0.0
        %1443 = vmatpush1.msra.mxu0 0.0
        %1444 = vmatprep.subr.mxu0 0.0
        %1445 = vmatpush1.msra.mxu0 0.0
        %1446 = vmatprep.subr.mxu0 0.0
        %1447 = vmatpush1.msra.mxu0 0.0
        %1448 = vmatprep.subr.mxu0 0.0
        %1449 = vmatpush1.msra.mxu0 0.0
        %1450 = vmatprep.subr.mxu0 0.0
        %1451 = vmatpush1.msra.mxu0 0.0
        %1452 = vmatprep.subr.mxu0 0.0
        %1453 = vmatpush1.msra.mxu0 0.0
        %1454 = vmatprep.subr.mxu0 0.0
        %1455 = vmatpush1.msra.mxu0 0.0
        %1456 = vmatprep.subr.mxu0 0.0
        %1457 = vmatpush1.msra.mxu0 0.0
        %1458 = vmatprep.subr.mxu0 0.0
        %1459 = vmatpush1.msra.mxu0 0.0
        %1460 = vmatprep.subr.mxu0 0.0
        %1461 = vmatpush1.msra.mxu0 0.0
        %1462 = vmatprep.subr.mxu0 0.0
        %1463 = vmatpush1.msra.mxu0 0.0
        %1464 = vmatprep.subr.mxu0 0.0
        %1465 = vmatpush1.msra.mxu0 0.0
        %1466 = vmatprep.subr.mxu0 0.0
        %1467 = vmatpush1.msra.mxu0 %v1432
        %1468 = vmatprep.subr.mxu0 0.0
        %1469 = vmatpush1.msra.mxu0 %v1430
        %1470 = vmatprep.subr.mxu0 0.0
        %1471 = vmatpush2.msra.mxu0 0.0
        %1472 = vmatprep.subr.mxu0 0.0
        %1473 = vmatpush2.msra.mxu0 0.0
        %1474 = vmatprep.subr.mxu0 0.0
        %1475 = vmatpush2.msra.mxu0 0.0
        %1476 = vmatprep.subr.mxu0 0.0
        %1477 = vmatpush2.msra.mxu0 0.0
        %1478 = vmatprep.subr.mxu0 0.0
        %1479 = vmatpush2.msra.mxu0 0.0
        %1480 = vmatprep.subr.mxu0 0.0
        %1481 = vmatpush2.msra.mxu0 0.0
        %1482 = vmatprep.subr.mxu0 0.0
        %1483 = vmatpush2.msra.mxu0 0.0
        %1484 = vmatprep.subr.mxu0 0.0
        %1485 = vmatpush2.msra.mxu0 0.0
        %1486 = vmatprep.subr.mxu0 0.0
        %1487 = vmatpush2.msra.mxu0 0.0
        %1488 = vmatprep.subr.mxu0 0.0
        %1489 = vmatpush2.msra.mxu0 0.0
        %1490 = vmatprep.subr.mxu0 0.0
        %1491 = vmatpush2.msra.mxu0 0.0
        %1492 = vmatprep.subr.mxu0 0.0
        %1493 = vmatpush2.msra.mxu0 0.0
        %1494 = vmatprep.subr.mxu0 0.0
        %1495 = vmatpush2.msra.mxu0 0.0
        %1496 = vmatprep.subr.mxu0 0.0
        %1497 = vmatpush2.msra.mxu0 0.0
        %1498 = vmatprep.subr.mxu0 0.0
        %1499 = vmatpush2.msra.mxu0 0.0
        %1500 = vmatprep.subr.mxu0 0.0
        %1501 = vmatpush2.msra.mxu0 0.0
        %1502 = vmatprep.mubr.f32.mxu0 0.0
        %1503 = vmatmul.mubr.f32.gmra.mxu0 %v1436
        %v1504 = vpop.f32.mrf.mxu0
        %v1505 = vadd.f32 0.0, %v1504
        %v1506 = vpop.f32.mrf.mxu0
        %1507 = vdwg.mxu0
        %v1508 = vrcp.pop %v1428
        %v1509 = vmul.f32 %v1505, %v1508
        %1510 = vrot.lane.b32.xlu0 %v654, 108
        %v1511 = vpop.permute.xlu0 %1510
        %1512 = vrot.lane.b32.xlu0 %v567, 108
        %v1513 = vpop.permute.xlu0 %1512
        %1514 = vrot.lane.b32.xlu0 %v572, 108
        %v1515 = vpop.permute.xlu0 %1514
        %v1516 = vsel %vm655, %v1511, 0
        %v1518 = vsel %vm655, %v1513, 0
        %v1520 = vsel %vm655, %v1515, 0
        %1522 = vmatprep.subr.mxu0 0.0
        %1523 = vmatpush1.xpose.msra.mxu0 0.0
        %1524 = vmatprep.subr.mxu0 0.0
        %1525 = vmatpush1.xpose.msra.mxu0 0.0
        %1526 = vmatprep.subr.mxu0 0.0
        %1527 = vmatpush1.xpose.msra.mxu0 0.0
        %1528 = vmatprep.subr.mxu0 0.0
        %1529 = vmatpush1.xpose.msra.mxu0 0.0
        %1530 = vmatprep.subr.mxu0 0.0
        %1531 = vmatpush1.xpose.msra.mxu0 0.0
        %1532 = vmatprep.subr.mxu0 0.0
        %1533 = vmatpush1.xpose.msra.mxu0 0.0
        %1534 = vmatprep.subr.mxu0 0.0
        %1535 = vmatpush1.xpose.msra.mxu0 0.0
        %1536 = vmatprep.subr.mxu0 0.0
        %1537 = vmatpush1.xpose.msra.mxu0 0.0
        %1538 = vmatprep.subr.mxu0 0.0
        %1539 = vmatpush1.xpose.msra.mxu0 0.0
        %1540 = vmatprep.subr.mxu0 0.0
        %1541 = vmatpush1.xpose.msra.mxu0 0.0
        %1542 = vmatprep.subr.mxu0 0.0
        %1543 = vmatpush1.xpose.msra.mxu0 0.0
        %1544 = vmatprep.subr.mxu0 0.0
        %1545 = vmatpush1.xpose.msra.mxu0 0.0
        %1546 = vmatprep.subr.mxu0 0.0
        %1547 = vmatpush1.xpose.msra.mxu0 0.0
        %1548 = vmatprep.subr.mxu0 0.0
        %1549 = vmatpush1.xpose.msra.mxu0 0.0
        %1550 = vmatprep.subr.mxu0 0.0
        %1551 = vmatpush1.xpose.msra.mxu0 %v1520
        %1552 = vmatprep.subr.mxu0 0.0
        %1553 = vmatpush1.xpose.msra.mxu0 %v1518
        %1554 = vmatprep.subr.mxu0 0.0
        %1555 = vmatpush2.xpose.msra.mxu0 0.0
        %1556 = vmatprep.subr.mxu0 0.0
        %1557 = vmatpush2.xpose.msra.mxu0 0.0
        %1558 = vmatprep.subr.mxu0 0.0
        %1559 = vmatpush2.xpose.msra.mxu0 0.0
        %1560 = vmatprep.subr.mxu0 0.0
        %1561 = vmatpush2.xpose.msra.mxu0 0.0
        %1562 = vmatprep.subr.mxu0 0.0
        %1563 = vmatpush2.xpose.msra.mxu0 0.0
        %1564 = vmatprep.subr.mxu0 0.0
        %1565 = vmatpush2.xpose.msra.mxu0 0.0
        %1566 = vmatprep.subr.mxu0 0.0
        %1567 = vmatpush2.xpose.msra.mxu0 0.0
        %1568 = vmatprep.subr.mxu0 0.0
        %1569 = vmatpush2.xpose.msra.mxu0 0.0
        %1570 = vmatprep.subr.mxu0 0.0
        %1571 = vmatpush2.xpose.msra.mxu0 0.0
        %1572 = vmatprep.subr.mxu0 0.0
        %1573 = vmatpush2.xpose.msra.mxu0 0.0
        %1574 = vmatprep.subr.mxu0 0.0
        %1575 = vmatpush2.xpose.msra.mxu0 0.0
        %1576 = vmatprep.subr.mxu0 0.0
        %1577 = vmatpush2.xpose.msra.mxu0 0.0
        %1578 = vmatprep.subr.mxu0 0.0
        %1579 = vmatpush2.xpose.msra.mxu0 0.0
        %1580 = vmatprep.subr.mxu0 0.0
        %1581 = vmatpush2.xpose.msra.mxu0 0.0
        %1582 = vmatprep.subr.mxu0 0.0
        %1583 = vmatpush2.xpose.msra.mxu0 0.0
        %1584 = vmatprep.subr.mxu0 0.0
        %1585 = vmatpush2.xpose.msra.mxu0 0.0
        %1586 = vmatprep.mubr.f32.mxu0 0.0
        %1587 = vmatmul.mubr.f32.gmra.mxu0 %v1516
        %v1588 = vpop.f32.mrf.mxu0
        %v1589 = vadd.f32 0.0, %v1588
        %v1590 = vpop.f32.mrf.mxu0
        %1591 = vdwg.mxu0
        %v1592 = vsel %vm735, %v1589, -inf
        %1593 = vmax.xlane.f32.xlu0 %v1592
        %v1594 = vpop.xlane.xlu0 %1593
        %v1595 = vsub.f32 %v1589, %v1594
        %v1596 = vmul.f32 %v1595, 1.442695
        %v1597 = vpow.pop %v1596
        %v1598 = vsel %vm735, %v1597, 0.0
        %1599 = vadd.xlane.f32.xlu0 %v1598
        %v1600 = vpop.xlane.xlu0 %1599
        %1601 = vrot.lane.b32.xlu0 %v646, 108
        %v1602 = vpop.permute.xlu0 %1601
        %1603 = vrot.lane.b32.xlu0 %v651, 108
        %v1604 = vpop.permute.xlu0 %1603
        %v1608 = vsel %vm735, %v1597, 0
        %1610 = vmatprep.subr.mxu0 0.0
        %1611 = vmatpush1.msra.mxu0 0.0
        %1612 = vmatprep.subr.mxu0 0.0
        %1613 = vmatpush1.msra.mxu0 0.0
        %1614 = vmatprep.subr.mxu0 0.0
        %1615 = vmatpush1.msra.mxu0 0.0
        %1616 = vmatprep.subr.mxu0 0.0
        %1617 = vmatpush1.msra.mxu0 0.0
        %1618 = vmatprep.subr.mxu0 0.0
        %1619 = vmatpush1.msra.mxu0 0.0
        %1620 = vmatprep.subr.mxu0 0.0
        %1621 = vmatpush1.msra.mxu0 0.0
        %1622 = vmatprep.subr.mxu0 0.0
        %1623 = vmatpush1.msra.mxu0 0.0
        %1624 = vmatprep.subr.mxu0 0.0
        %1625 = vmatpush1.msra.mxu0 0.0
        %1626 = vmatprep.subr.mxu0 0.0
        %1627 = vmatpush1.msra.mxu0 0.0
        %1628 = vmatprep.subr.mxu0 0.0
        %1629 = vmatpush1.msra.mxu0 0.0
        %1630 = vmatprep.subr.mxu0 0.0
        %1631 = vmatpush1.msra.mxu0 0.0
        %1632 = vmatprep.subr.mxu0 0.0
        %1633 = vmatpush1.msra.mxu0 0.0
        %1634 = vmatprep.subr.mxu0 0.0
        %1635 = vmatpush1.msra.mxu0 0.0
        %1636 = vmatprep.subr.mxu0 0.0
        %1637 = vmatpush1.msra.mxu0 0.0
        %1638 = vmatprep.subr.mxu0 0.0
        %1639 = vmatpush1.msra.mxu0 %v1604
        %1640 = vmatprep.subr.mxu0 0.0
        %1641 = vmatpush1.msra.mxu0 %v1602
        %1642 = vmatprep.subr.mxu0 0.0
        %1643 = vmatpush2.msra.mxu0 0.0
        %1644 = vmatprep.subr.mxu0 0.0
        %1645 = vmatpush2.msra.mxu0 0.0
        %1646 = vmatprep.subr.mxu0 0.0
        %1647 = vmatpush2.msra.mxu0 0.0
        %1648 = vmatprep.subr.mxu0 0.0
        %1649 = vmatpush2.msra.mxu0 0.0
        %1650 = vmatprep.subr.mxu0 0.0
        %1651 = vmatpush2.msra.mxu0 0.0
        %1652 = vmatprep.subr.mxu0 0.0
        %1653 = vmatpush2.msra.mxu0 0.0
        %1654 = vmatprep.subr.mxu0 0.0
        %1655 = vmatpush2.msra.mxu0 0.0
        %1656 = vmatprep.subr.mxu0 0.0
        %1657 = vmatpush2.msra.mxu0 0.0
        %1658 = vmatprep.subr.mxu0 0.0
        %1659 = vmatpush2.msra.mxu0 0.0
        %1660 = vmatprep.subr.mxu0 0.0
        %1661 = vmatpush2.msra.mxu0 0.0
        %1662 = vmatprep.subr.mxu0 0.0
        %1663 = vmatpush2.msra.mxu0 0.0
        %1664 = vmatprep.subr.mxu0 0.0
        %1665 = vmatpush2.msra.mxu0 0.0
        %1666 = vmatprep.subr.mxu0 0.0
        %1667 = vmatpush2.msra.mxu0 0.0
        %1668 = vmatprep.subr.mxu0 0.0
        %1669 = vmatpush2.msra.mxu0 0.0
        %1670 = vmatprep.subr.mxu0 0.0
        %1671 = vmatpush2.msra.mxu0 0.0
        %1672 = vmatprep.subr.mxu0 0.0
        %1673 = vmatpush2.msra.mxu0 0.0
        %1674 = vmatprep.mubr.f32.mxu0 0.0
        %1675 = vmatmul.mubr.f32.gmra.mxu0 %v1608
        %v1676 = vpop.f32.mrf.mxu0
        %v1677 = vadd.f32 0.0, %v1676
        %v1678 = vpop.f32.mrf.mxu0
        %1679 = vdwg.mxu0
        %v1680 = vrcp.pop %v1600
        %v1681 = vmul.f32 %v1677, %v1680
        %1682 = vrot.lane.b32.xlu0 %v654, 104
        %v1683 = vpop.permute.xlu0 %1682
        %1684 = vrot.lane.b32.xlu0 %v567, 104
        %v1685 = vpop.permute.xlu0 %1684
        %1686 = vrot.lane.b32.xlu0 %v572, 104
        %v1687 = vpop.permute.xlu0 %1686
        %v1688 = vsel %vm655, %v1683, 0
        %v1690 = vsel %vm655, %v1685, 0
        %v1692 = vsel %vm655, %v1687, 0
        %1694 = vmatprep.subr.mxu0 0.0
        %1695 = vmatpush1.xpose.msra.mxu0 0.0
        %1696 = vmatprep.subr.mxu0 0.0
        %1697 = vmatpush1.xpose.msra.mxu0 0.0
        %1698 = vmatprep.subr.mxu0 0.0
        %1699 = vmatpush1.xpose.msra.mxu0 0.0
        %1700 = vmatprep.subr.mxu0 0.0
        %1701 = vmatpush1.xpose.msra.mxu0 0.0
        %1702 = vmatprep.subr.mxu0 0.0
        %1703 = vmatpush1.xpose.msra.mxu0 0.0
        %1704 = vmatprep.subr.mxu0 0.0
        %1705 = vmatpush1.xpose.msra.mxu0 0.0
        %1706 = vmatprep.subr.mxu0 0.0
        %1707 = vmatpush1.xpose.msra.mxu0 0.0
        %1708 = vmatprep.subr.mxu0 0.0
        %1709 = vmatpush1.xpose.msra.mxu0 0.0
        %1710 = vmatprep.subr.mxu0 0.0
        %1711 = vmatpush1.xpose.msra.mxu0 0.0
        %1712 = vmatprep.subr.mxu0 0.0
        %1713 = vmatpush1.xpose.msra.mxu0 0.0
        %1714 = vmatprep.subr.mxu0 0.0
        %1715 = vmatpush1.xpose.msra.mxu0 0.0
        %1716 = vmatprep.subr.mxu0 0.0
        %1717 = vmatpush1.xpose.msra.mxu0 0.0
        %1718 = vmatprep.subr.mxu0 0.0
        %1719 = vmatpush1.xpose.msra.mxu0 0.0
        %1720 = vmatprep.subr.mxu0 0.0
        %1721 = vmatpush1.xpose.msra.mxu0 0.0
        %1722 = vmatprep.subr.mxu0 0.0
        %1723 = vmatpush1.xpose.msra.mxu0 %v1692
        %1724 = vmatprep.subr.mxu0 0.0
        %1725 = vmatpush1.xpose.msra.mxu0 %v1690
        %1726 = vmatprep.subr.mxu0 0.0
        %1727 = vmatpush2.xpose.msra.mxu0 0.0
        %1728 = vmatprep.subr.mxu0 0.0
        %1729 = vmatpush2.xpose.msra.mxu0 0.0
        %1730 = vmatprep.subr.mxu0 0.0
        %1731 = vmatpush2.xpose.msra.mxu0 0.0
        %1732 = vmatprep.subr.mxu0 0.0
        %1733 = vmatpush2.xpose.msra.mxu0 0.0
        %1734 = vmatprep.subr.mxu0 0.0
        %1735 = vmatpush2.xpose.msra.mxu0 0.0
        %1736 = vmatprep.subr.mxu0 0.0
        %1737 = vmatpush2.xpose.msra.mxu0 0.0
        %1738 = vmatprep.subr.mxu0 0.0
        %1739 = vmatpush2.xpose.msra.mxu0 0.0
        %1740 = vmatprep.subr.mxu0 0.0
        %1741 = vmatpush2.xpose.msra.mxu0 0.0
        %1742 = vmatprep.subr.mxu0 0.0
        %1743 = vmatpush2.xpose.msra.mxu0 0.0
        %1744 = vmatprep.subr.mxu0 0.0
        %1745 = vmatpush2.xpose.msra.mxu0 0.0
        %1746 = vmatprep.subr.mxu0 0.0
        %1747 = vmatpush2.xpose.msra.mxu0 0.0
        %1748 = vmatprep.subr.mxu0 0.0
        %1749 = vmatpush2.xpose.msra.mxu0 0.0
        %1750 = vmatprep.subr.mxu0 0.0
        %1751 = vmatpush2.xpose.msra.mxu0 0.0
        %1752 = vmatprep.subr.mxu0 0.0
        %1753 = vmatpush2.xpose.msra.mxu0 0.0
        %1754 = vmatprep.subr.mxu0 0.0
        %1755 = vmatpush2.xpose.msra.mxu0 0.0
        %1756 = vmatprep.subr.mxu0 0.0
        %1757 = vmatpush2.xpose.msra.mxu0 0.0
        %1758 = vmatprep.mubr.f32.mxu0 0.0
        %1759 = vmatmul.mubr.f32.gmra.mxu0 %v1688
        %v1760 = vpop.f32.mrf.mxu0
        %v1761 = vadd.f32 0.0, %v1760
        %v1762 = vpop.f32.mrf.mxu0
        %1763 = vdwg.mxu0
        %v1764 = vsel %vm735, %v1761, -inf
        %1765 = vmax.xlane.f32.xlu0 %v1764
        %v1766 = vpop.xlane.xlu0 %1765
        %v1767 = vsub.f32 %v1761, %v1766
        %v1768 = vmul.f32 %v1767, 1.442695
        %v1769 = vpow.pop %v1768
        %v1770 = vsel %vm735, %v1769, 0.0
        %1771 = vadd.xlane.f32.xlu0 %v1770
        %v1772 = vpop.xlane.xlu0 %1771
        %1773 = vrot.lane.b32.xlu0 %v646, 104
        %v1774 = vpop.permute.xlu0 %1773
        %1775 = vrot.lane.b32.xlu0 %v651, 104
        %v1776 = vpop.permute.xlu0 %1775
        %v1780 = vsel %vm735, %v1769, 0
        %1782 = vmatprep.subr.mxu0 0.0
        %1783 = vmatpush1.msra.mxu0 0.0
        %1784 = vmatprep.subr.mxu0 0.0
        %1785 = vmatpush1.msra.mxu0 0.0
        %1786 = vmatprep.subr.mxu0 0.0
        %1787 = vmatpush1.msra.mxu0 0.0
        %1788 = vmatprep.subr.mxu0 0.0
        %1789 = vmatpush1.msra.mxu0 0.0
        %1790 = vmatprep.subr.mxu0 0.0
        %1791 = vmatpush1.msra.mxu0 0.0
        %1792 = vmatprep.subr.mxu0 0.0
        %1793 = vmatpush1.msra.mxu0 0.0
        %1794 = vmatprep.subr.mxu0 0.0
        %1795 = vmatpush1.msra.mxu0 0.0
        %1796 = vmatprep.subr.mxu0 0.0
        %1797 = vmatpush1.msra.mxu0 0.0
        %1798 = vmatprep.subr.mxu0 0.0
        %1799 = vmatpush1.msra.mxu0 0.0
        %1800 = vmatprep.subr.mxu0 0.0
        %1801 = vmatpush1.msra.mxu0 0.0
        %1802 = vmatprep.subr.mxu0 0.0
        %1803 = vmatpush1.msra.mxu0 0.0
        %1804 = vmatprep.subr.mxu0 0.0
        %1805 = vmatpush1.msra.mxu0 0.0
        %1806 = vmatprep.subr.mxu0 0.0
        %1807 = vmatpush1.msra.mxu0 0.0
        %1808 = vmatprep.subr.mxu0 0.0
        %1809 = vmatpush1.msra.mxu0 0.0
        %1810 = vmatprep.subr.mxu0 0.0
        %1811 = vmatpush1.msra.mxu0 %v1776
        %1812 = vmatprep.subr.mxu0 0.0
        %1813 = vmatpush1.msra.mxu0 %v1774
        %1814 = vmatprep.subr.mxu0 0.0
        %1815 = vmatpush2.msra.mxu0 0.0
        %1816 = vmatprep.subr.mxu0 0.0
        %1817 = vmatpush2.msra.mxu0 0.0
        %1818 = vmatprep.subr.mxu0 0.0
        %1819 = vmatpush2.msra.mxu0 0.0
        %1820 = vmatprep.subr.mxu0 0.0
        %1821 = vmatpush2.msra.mxu0 0.0
        %1822 = vmatprep.subr.mxu0 0.0
        %1823 = vmatpush2.msra.mxu0 0.0
        %1824 = vmatprep.subr.mxu0 0.0
        %1825 = vmatpush2.msra.mxu0 0.0
        %1826 = vmatprep.subr.mxu0 0.0
        %1827 = vmatpush2.msra.mxu0 0.0
        %1828 = vmatprep.subr.mxu0 0.0
        %1829 = vmatpush2.msra.mxu0 0.0
        %1830 = vmatprep.subr.mxu0 0.0
        %1831 = vmatpush2.msra.mxu0 0.0
        %1832 = vmatprep.subr.mxu0 0.0
        %1833 = vmatpush2.msra.mxu0 0.0
        %1834 = vmatprep.subr.mxu0 0.0
        %1835 = vmatpush2.msra.mxu0 0.0
        %1836 = vmatprep.subr.mxu0 0.0
        %1837 = vmatpush2.msra.mxu0 0.0
        %1838 = vmatprep.subr.mxu0 0.0
        %1839 = vmatpush2.msra.mxu0 0.0
        %1840 = vmatprep.subr.mxu0 0.0
        %1841 = vmatpush2.msra.mxu0 0.0
        %1842 = vmatprep.subr.mxu0 0.0
        %1843 = vmatpush2.msra.mxu0 0.0
        %1844 = vmatprep.subr.mxu0 0.0
        %1845 = vmatpush2.msra.mxu0 0.0
        %1846 = vmatprep.mubr.f32.mxu0 0.0
        %1847 = vmatmul.mubr.f32.gmra.mxu0 %v1780
        %v1848 = vpop.f32.mrf.mxu0
        %v1849 = vadd.f32 0.0, %v1848
        %v1850 = vpop.f32.mrf.mxu0
        %1851 = vdwg.mxu0
        %v1852 = vrcp.pop %v1772
        %v1853 = vmul.f32 %v1849, %v1852
        %1854 = vrot.lane.b32.xlu0 %v654, 100
        %v1855 = vpop.permute.xlu0 %1854
        %1856 = vrot.lane.b32.xlu0 %v567, 100
        %v1857 = vpop.permute.xlu0 %1856
        %1858 = vrot.lane.b32.xlu0 %v572, 100
        %v1859 = vpop.permute.xlu0 %1858
        %v1860 = vsel %vm655, %v1855, 0
        %v1862 = vsel %vm655, %v1857, 0
        %v1864 = vsel %vm655, %v1859, 0
        %1866 = vmatprep.subr.mxu0 0.0
        %1867 = vmatpush1.xpose.msra.mxu0 0.0
        %1868 = vmatprep.subr.mxu0 0.0
        %1869 = vmatpush1.xpose.msra.mxu0 0.0
        %1870 = vmatprep.subr.mxu0 0.0
        %1871 = vmatpush1.xpose.msra.mxu0 0.0
        %1872 = vmatprep.subr.mxu0 0.0
        %1873 = vmatpush1.xpose.msra.mxu0 0.0
        %1874 = vmatprep.subr.mxu0 0.0
        %1875 = vmatpush1.xpose.msra.mxu0 0.0
        %1876 = vmatprep.subr.mxu0 0.0
        %1877 = vmatpush1.xpose.msra.mxu0 0.0
        %1878 = vmatprep.subr.mxu0 0.0
        %1879 = vmatpush1.xpose.msra.mxu0 0.0
        %1880 = vmatprep.subr.mxu0 0.0
        %1881 = vmatpush1.xpose.msra.mxu0 0.0
        %1882 = vmatprep.subr.mxu0 0.0
        %1883 = vmatpush1.xpose.msra.mxu0 0.0
        %1884 = vmatprep.subr.mxu0 0.0
        %1885 = vmatpush1.xpose.msra.mxu0 0.0
        %1886 = vmatprep.subr.mxu0 0.0
        %1887 = vmatpush1.xpose.msra.mxu0 0.0
        %1888 = vmatprep.subr.mxu0 0.0
        %1889 = vmatpush1.xpose.msra.mxu0 0.0
        %1890 = vmatprep.subr.mxu0 0.0
        %1891 = vmatpush1.xpose.msra.mxu0 0.0
        %1892 = vmatprep.subr.mxu0 0.0
        %1893 = vmatpush1.xpose.msra.mxu0 0.0
        %1894 = vmatprep.subr.mxu0 0.0
        %1895 = vmatpush1.xpose.msra.mxu0 %v1864
        %1896 = vmatprep.subr.mxu0 0.0
        %1897 = vmatpush1.xpose.msra.mxu0 %v1862
        %1898 = vmatprep.subr.mxu0 0.0
        %1899 = vmatpush2.xpose.msra.mxu0 0.0
        %1900 = vmatprep.subr.mxu0 0.0
        %1901 = vmatpush2.xpose.msra.mxu0 0.0
        %1902 = vmatprep.subr.mxu0 0.0
        %1903 = vmatpush2.xpose.msra.mxu0 0.0
        %1904 = vmatprep.subr.mxu0 0.0
        %1905 = vmatpush2.xpose.msra.mxu0 0.0
        %1906 = vmatprep.subr.mxu0 0.0
        %1907 = vmatpush2.xpose.msra.mxu0 0.0
        %1908 = vmatprep.subr.mxu0 0.0
        %1909 = vmatpush2.xpose.msra.mxu0 0.0
        %1910 = vmatprep.subr.mxu0 0.0
        %1911 = vmatpush2.xpose.msra.mxu0 0.0
        %1912 = vmatprep.subr.mxu0 0.0
        %1913 = vmatpush2.xpose.msra.mxu0 0.0
        %1914 = vmatprep.subr.mxu0 0.0
        %1915 = vmatpush2.xpose.msra.mxu0 0.0
        %1916 = vmatprep.subr.mxu0 0.0
        %1917 = vmatpush2.xpose.msra.mxu0 0.0
        %1918 = vmatprep.subr.mxu0 0.0
        %1919 = vmatpush2.xpose.msra.mxu0 0.0
        %1920 = vmatprep.subr.mxu0 0.0
        %1921 = vmatpush2.xpose.msra.mxu0 0.0
        %1922 = vmatprep.subr.mxu0 0.0
        %1923 = vmatpush2.xpose.msra.mxu0 0.0
        %1924 = vmatprep.subr.mxu0 0.0
        %1925 = vmatpush2.xpose.msra.mxu0 0.0
        %1926 = vmatprep.subr.mxu0 0.0
        %1927 = vmatpush2.xpose.msra.mxu0 0.0
        %1928 = vmatprep.subr.mxu0 0.0
        %1929 = vmatpush2.xpose.msra.mxu0 0.0
        %1930 = vmatprep.mubr.f32.mxu0 0.0
        %1931 = vmatmul.mubr.f32.gmra.mxu0 %v1860
        %v1932 = vpop.f32.mrf.mxu0
        %v1933 = vadd.f32 0.0, %v1932
        %v1934 = vpop.f32.mrf.mxu0
        %1935 = vdwg.mxu0
        %v1936 = vsel %vm735, %v1933, -inf
        %1937 = vmax.xlane.f32.xlu0 %v1936
        %v1938 = vpop.xlane.xlu0 %1937
        %v1939 = vsub.f32 %v1933, %v1938
        %v1940 = vmul.f32 %v1939, 1.442695
        %v1941 = vpow.pop %v1940
        %v1942 = vsel %vm735, %v1941, 0.0
        %1943 = vadd.xlane.f32.xlu0 %v1942
        %v1944 = vpop.xlane.xlu0 %1943
        %1945 = vrot.lane.b32.xlu0 %v646, 100
        %v1946 = vpop.permute.xlu0 %1945
        %1947 = vrot.lane.b32.xlu0 %v651, 100
        %v1948 = vpop.permute.xlu0 %1947
        %v1952 = vsel %vm735, %v1941, 0
        %1954 = vmatprep.subr.mxu0 0.0
        %1955 = vmatpush1.msra.mxu0 0.0
        %1956 = vmatprep.subr.mxu0 0.0
        %1957 = vmatpush1.msra.mxu0 0.0
        %1958 = vmatprep.subr.mxu0 0.0
        %1959 = vmatpush1.msra.mxu0 0.0
        %1960 = vmatprep.subr.mxu0 0.0
        %1961 = vmatpush1.msra.mxu0 0.0
        %1962 = vmatprep.subr.mxu0 0.0
        %1963 = vmatpush1.msra.mxu0 0.0
        %1964 = vmatprep.subr.mxu0 0.0
        %1965 = vmatpush1.msra.mxu0 0.0
        %1966 = vmatprep.subr.mxu0 0.0
        %1967 = vmatpush1.msra.mxu0 0.0
        %1968 = vmatprep.subr.mxu0 0.0
        %1969 = vmatpush1.msra.mxu0 0.0
        %1970 = vmatprep.subr.mxu0 0.0
        %1971 = vmatpush1.msra.mxu0 0.0
        %1972 = vmatprep.subr.mxu0 0.0
        %1973 = vmatpush1.msra.mxu0 0.0
        %1974 = vmatprep.subr.mxu0 0.0
        %1975 = vmatpush1.msra.mxu0 0.0
        %1976 = vmatprep.subr.mxu0 0.0
        %1977 = vmatpush1.msra.mxu0 0.0
        %1978 = vmatprep.subr.mxu0 0.0
        %1979 = vmatpush1.msra.mxu0 0.0
        %1980 = vmatprep.subr.mxu0 0.0
        %1981 = vmatpush1.msra.mxu0 0.0
        %1982 = vmatprep.subr.mxu0 0.0
        %1983 = vmatpush1.msra.mxu0 %v1948
        %1984 = vmatprep.subr.mxu0 0.0
        %1985 = vmatpush1.msra.mxu0 %v1946
        %1986 = vmatprep.subr.mxu0 0.0
        %1987 = vmatpush2.msra.mxu0 0.0
        %1988 = vmatprep.subr.mxu0 0.0
        %1989 = vmatpush2.msra.mxu0 0.0
        %1990 = vmatprep.subr.mxu0 0.0
        %1991 = vmatpush2.msra.mxu0 0.0
        %1992 = vmatprep.subr.mxu0 0.0
        %1993 = vmatpush2.msra.mxu0 0.0
        %1994 = vmatprep.subr.mxu0 0.0
        %1995 = vmatpush2.msra.mxu0 0.0
        %1996 = vmatprep.subr.mxu0 0.0
        %1997 = vmatpush2.msra.mxu0 0.0
        %1998 = vmatprep.subr.mxu0 0.0
        %1999 = vmatpush2.msra.mxu0 0.0
        %2000 = vmatprep.subr.mxu0 0.0
        %2001 = vmatpush2.msra.mxu0 0.0
        %2002 = vmatprep.subr.mxu0 0.0
        %2003 = vmatpush2.msra.mxu0 0.0
        %2004 = vmatprep.subr.mxu0 0.0
        %2005 = vmatpush2.msra.mxu0 0.0
        %2006 = vmatprep.subr.mxu0 0.0
        %2007 = vmatpush2.msra.mxu0 0.0
        %2008 = vmatprep.subr.mxu0 0.0
        %2009 = vmatpush2.msra.mxu0 0.0
        %2010 = vmatprep.subr.mxu0 0.0
        %2011 = vmatpush2.msra.mxu0 0.0
        %2012 = vmatprep.subr.mxu0 0.0
        %2013 = vmatpush2.msra.mxu0 0.0
        %2014 = vmatprep.subr.mxu0 0.0
        %2015 = vmatpush2.msra.mxu0 0.0
        %2016 = vmatprep.subr.mxu0 0.0
        %2017 = vmatpush2.msra.mxu0 0.0
        %2018 = vmatprep.mubr.f32.mxu0 0.0
        %2019 = vmatmul.mubr.f32.gmra.mxu0 %v1952
        %v2020 = vpop.f32.mrf.mxu0
        %v2021 = vadd.f32 0.0, %v2020
        %v2022 = vpop.f32.mrf.mxu0
        %2023 = vdwg.mxu0
        %v2024 = vrcp.pop %v1944
        %v2025 = vmul.f32 %v2021, %v2024
        %2027 = vrot.lane.b32.xlu0 %v993, 4
        %v2028 = vpop.permute.xlu0 %2027
        %2031 = vrot.lane.b32.xlu0 %v1165, 8
        %v2032 = vpop.permute.xlu0 %2031
        %2035 = vrot.lane.b32.xlu0 %v1337, 12
        %v2036 = vpop.permute.xlu0 %2035
        %2039 = vrot.lane.b32.xlu0 %v1509, 16
        %v2040 = vpop.permute.xlu0 %2039
        %2043 = vrot.lane.b32.xlu0 %v1681, 20
        %v2044 = vpop.permute.xlu0 %2043
        %2047 = vrot.lane.b32.xlu0 %v1853, 24
        %v2048 = vpop.permute.xlu0 %2047
        %2051 = vrot.lane.b32.xlu0 %v2025, 28
        %v2052 = vpop.permute.xlu0 %2051
        %v2054 = vsel %vm655, %v819, %v2028
        %vm2055 = vcmask 64512
        %v2056 = vsel %vm2055, %v2054, %v2032
        %vm2057 = vcmask 97280
        %v2058 = vsel %vm2057, %v2056, %v2036
        %v2059 = vsel %vm735, %v2058, %v2040
        %vm2060 = vcmask 162816
        %v2061 = vsel %vm2060, %v2059, %v2044
        %vm2062 = vcmask 195584
        %v2063 = vsel %vm2062, %v2061, %v2048
        %vm2064 = vcmask 228352
        %v2065 = vsel %vm2064, %v2063, %v2052
        %v2066 = vld [vmem:[#allocation11] sm:$0xff]
        %v2067 = vld [vmem:[#allocation11 + $0x8] sm:$0xff]
        %v2068 = vld [vmem:[#allocation11 + $0x10] sm:$0xff]
        %v2069 = vld [vmem:[#allocation11 + $0x18] sm:$0xff]
        %v2070 = vld [vmem:[%s6] sm:$0x1]
        %v2072 = vlaneseq
        %v2073 = vshrl.u32 %v2072, 7
        %v2074 = vsub.s32 0, %v2073
        %v2075 = vrot.slane %v2070, %v2074
        %v2078 = vsel %vm416, %v2065, 0
        %2080 = vmatprep.subr.mxu0 0.0
        %2081 = vmatpush1.msra.mxu0 0.0
        %2082 = vmatprep.subr.mxu0 0.0
        %2083 = vmatpush1.msra.mxu0 0.0
        %2084 = vmatprep.subr.mxu0 0.0
        %2085 = vmatpush1.msra.mxu0 0.0
        %2086 = vmatprep.subr.mxu0 0.0
        %2087 = vmatpush1.msra.mxu0 0.0
        %2088 = vmatprep.subr.mxu0 0.0
        %2089 = vmatpush1.msra.mxu0 0.0
        %2090 = vmatprep.subr.mxu0 0.0
        %2091 = vmatpush1.msra.mxu0 0.0
        %2092 = vmatprep.subr.mxu0 0.0
        %2093 = vmatpush1.msra.mxu0 0.0
        %2094 = vmatprep.subr.mxu0 0.0
        %2095 = vmatpush1.msra.mxu0 0.0
        %2096 = vmatprep.subr.mxu0 0.0
        %2097 = vmatpush1.msra.mxu0 0.0
        %2098 = vmatprep.subr.mxu0 0.0
        %2099 = vmatpush1.msra.mxu0 0.0
        %2100 = vmatprep.subr.mxu0 0.0
        %2101 = vmatpush1.msra.mxu0 0.0
        %2102 = vmatprep.subr.mxu0 0.0
        %2103 = vmatpush1.msra.mxu0 0.0
        %2104 = vmatprep.subr.mxu0 0.0
        %2105 = vmatpush1.msra.mxu0 %v2069
        %2106 = vmatprep.subr.mxu0 0.0
        %2107 = vmatpush1.msra.mxu0 %v2068
        %2108 = vmatprep.subr.mxu0 0.0
        %2109 = vmatpush1.msra.mxu0 %v2067
        %2110 = vmatprep.subr.mxu0 0.0
        %2111 = vmatpush1.msra.mxu0 %v2066
        %2112 = vmatprep.subr.mxu0 0.0
        %2113 = vmatpush2.msra.mxu0 0.0
        %2114 = vmatprep.subr.mxu0 0.0
        %2115 = vmatpush2.msra.mxu0 0.0
        %2116 = vmatprep.subr.mxu0 0.0
        %2117 = vmatpush2.msra.mxu0 0.0
        %2118 = vmatprep.subr.mxu0 0.0
        %2119 = vmatpush2.msra.mxu0 0.0
        %2120 = vmatprep.subr.mxu0 0.0
        %2121 = vmatpush2.msra.mxu0 0.0
        %2122 = vmatprep.subr.mxu0 0.0
        %2123 = vmatpush2.msra.mxu0 0.0
        %2124 = vmatprep.subr.mxu0 0.0
        %2125 = vmatpush2.msra.mxu0 0.0
        %2126 = vmatprep.subr.mxu0 0.0
        %2127 = vmatpush2.msra.mxu0 0.0
        %2128 = vmatprep.subr.mxu0 0.0
        %2129 = vmatpush2.msra.mxu0 0.0
        %2130 = vmatprep.subr.mxu0 0.0
        %2131 = vmatpush2.msra.mxu0 0.0
        %2132 = vmatprep.subr.mxu0 0.0
        %2133 = vmatpush2.msra.mxu0 0.0
        %2134 = vmatprep.subr.mxu0 0.0
        %2135 = vmatpush2.msra.mxu0 0.0
        %2136 = vmatprep.subr.mxu0 0.0
        %2137 = vmatpush2.msra.mxu0 0.0
        %2138 = vmatprep.subr.mxu0 0.0
        %2139 = vmatpush2.msra.mxu0 0.0
        %2140 = vmatprep.subr.mxu0 0.0
        %2141 = vmatpush2.msra.mxu0 0.0
        %2142 = vmatprep.subr.mxu0 0.0
        %2143 = vmatpush2.msra.mxu0 0.0
        %2144 = vmatprep.mubr.f32.mxu0 0.0
        %2145 = vmatmul.mubr.f32.gmra.mxu0 %v2078
        %v2146 = vpop.f32.mrf.mxu0
        %v2147 = vadd.f32 %v2075, %v2146
        %v2148 = vpop.f32.mrf.mxu0
        %2149 = vdwg.mxu0
        %2150 = vst.msk [vmem:[%s408] sm:$0xff] %vm416, %v2147
        %s2151 = sand.u32 %s210, 1
        %s2152 = scalar_lea.sflag [#allocation4], %s2151
        %s2153 = sand.u32 %s210, 1
        %s2154 = smul.addr %s2153, 8
        %s2155 = scalar_lea.vmem [#allocation13], %s2154
        // Predicated region
        $region73: #{tpu_custom_call.1} parent=47 // pred_check
          %p2156 = pneg %p220
        $region74: #{tpu_custom_call.1} parent=47 // pred_check_branch
          %2158 = sbr.rel (%p2156) target = $region76
        $region75: #{tpu_custom_call.1} parent=47 // pred_region
          %s2160 = ssub.s32 128, 128
          %2161 = vsyncadd %s2152, %s2160
          %s2162 = sadd.s32 %s34, %s33
          %s2163 = smul.addr %s2162, 128
          %s2164 = scalar_lea.hbm %s7, %s2163
          %s2166 = sshll.u32 %s2155, 4
          %s2167 = int_to_ptr.vmem [resolvable:$true] %s2166
          %2169 = dma.vmem_to_hbm [thread:$0]  %s2167, 128, %s2164, %s2152
        $region76: #{tpu_custom_call.1} parent=47 // pred_fallthru
          _
      $region48: #{tpu_custom_call.1} parent=5 // pred_fallthru
        _
      %p2170 = scmp.le.s32.totalorder 2, %s24
      // Predicated region
      $region77: #{tpu_custom_call.1} parent=5 // pred_check
        %p2171 = pneg %p2170
      $region78: #{tpu_custom_call.1} parent=5 // pred_check_branch
        %2173 = sbr.rel (%p2171) target = $region80
      $region79: #{tpu_custom_call.1} parent=5 // pred_region
        %s2174 = ssub.s32 %s24, 2
        // Predicated region
        $region81: #{tpu_custom_call.1} parent=79 // pred_check
          %p2175 = pneg %p226
        $region82: #{tpu_custom_call.1} parent=79 // pred_check_branch
          %2177 = sbr.rel (%p2175) target = $region84
        $region83: #{tpu_custom_call.1} parent=79 // pred_region
          %s2178 = sand.u32 %s211, 1
          %s2179 = scalar_lea.sflag [#allocation4], %s2178
          %s2180 = sand.u32 %s211, 1
          %s2181 = smul.addr %s2180, 8
          %s2182 = scalar_lea.vmem [#allocation13], %s2181
          %2183 = dma.done %s2179, 128
        $region84: #{tpu_custom_call.1} parent=79 // pred_fallthru
          _
      $region80: #{tpu_custom_call.1} parent=5 // pred_fallthru
        _
    $region6: #{tpu_custom_call.1} parent=1 // loop_footer
      %s28 = sadd.s32 1, %s24
    $region7: #{tpu_custom_call.1} parent=1 // loop_footer_branch
      %23 = sbr.rel target = $region3
    $region8: #{tpu_custom_call.1} parent=1 // loop_exit
      _
    %2184 = vsyncpa [#allocation3], 1
    %s2185 = scalar_lea.sflag [#allocation3], 1
    %2186 = vsyncpa %s2185, 1
    %2187 = vsyncpa [#allocation6], 1
    %s2188 = scalar_lea.sflag [#allocation6], 1
    %2189 = vsyncpa %s2188, 1
    %2190 = vsyncpa [#allocation9], 1
    %2191 = vsyncpa [#allocation12], 1
    %2192 = vsyncpa [#allocation4], 1
    %s2193 = scalar_lea.sflag [#allocation4], 1
    %2194 = vsyncpa %s2193, 1

</llo_original>
